<compile_context>
chip_gen: v5e
topology: v5e:2x2
jax: 0.10.0
libtpu: 0.0.40
codegen_flags: <defaults>
</compile_context>

<pallas_src>
from functools import partial

import jax
import jax.numpy as jnp
from jax.experimental import pallas as pl
from jax.experimental.pallas import tpu as pltpu  # noqa: F401  (TPU backend)


def _matmul_bias_tanh_kernel(a_ref, b_ref, bias_ref, o_ref):
    # a_ref: (P, K) patches, b_ref: (K, C_out) weights, bias_ref: (1, C_out)
    acc = jnp.dot(a_ref[...], b_ref[...], preferred_element_type=jnp.float32)
    acc = acc + bias_ref[...]
    o_ref[...] = jnp.tanh(acc).astype(o_ref.dtype)


@partial(jax.jit, static_argnames=("stride",))
def conv2d_tanh_pallas(x, weight, bias, stride=(48, 1)):
    """Conv2d(C_in -> C_out, kernel (KH, KW), stride) + tanh, NCHW layout."""
    N, C_in, H, W = x.shape
    C_out, _, KH, KW = weight.shape
    SH, SW = stride
    H_out = (H - KH) // SH + 1
    W_out = (W - KW) // SW + 1

    # --- im2col as a single slice + reshape (valid for this module's shapes:
    #     N == 1, H_out == 1, KW == 1, SW == 1). No dynamic_slice loop, no
    #     extra HBM materialization; fuses into the jitted glue. ---
    assert N == 1 and H_out == 1 and KW == 1 and SW == 1 and W_out == W
    # element (c*KH + kh, w) == x[0, c, kh, w]  -> matches (C_in, KH, KW) flatten
    a = x[0, :, :KH, :].reshape(C_in * KH, W_out).T        # (P, K)
    P, K = a.shape

    # weight (C_out, C_in, KH, KW) -> (K, C_out), matching patch flatten order
    b = weight.reshape(C_out, K).T                          # (K, C_out)
    bias2d = bias.reshape(1, C_out)                         # (1, C_out)

    bytes_accessed = 4 * (P * K + K * C_out + C_out + P * C_out)

    # --- Pallas kernel: matmul + bias + tanh, single full-array block ---
    out = pl.pallas_call(
        _matmul_bias_tanh_kernel,
        out_shape=jax.ShapeDtypeStruct((P, C_out), x.dtype),
        in_specs=[
            pl.BlockSpec((P, K), lambda: (0, 0)),
            pl.BlockSpec((K, C_out), lambda: (0, 0)),
            pl.BlockSpec((1, C_out), lambda: (0, 0)),
        ],
        out_specs=pl.BlockSpec((P, C_out), lambda: (0, 0)),
        cost_estimate=pl.CostEstimate(
            flops=2 * P * K * C_out,
            transcendentals=P * C_out,
            bytes_accessed=bytes_accessed,
        ),
        # NOTE: no vmem_limit_bytes override — actual need is ~1.7 MiB, well
        # under the default scoped-VMEM limit on v5e/v6e/v7x.
    )(a, b, bias2d)

    # (P, C_out) with P ordered as (n, ho, wo) -> NCHW (N, C_out, H_out, W_out)
    out = out.reshape(N, H_out, W_out, C_out).transpose(0, 3, 1, 2)
    return out


if __name__ == "__main__":
    key = jax.random.PRNGKey(0)
    kx, kw, kb = jax.random.split(key, 3)

    N, C_in, H, W = 1, 259, 20, 2
    C_out, KH, KW = 128, 6, 1

    x = jax.random.normal(kx, (N, C_in, H, W), dtype=jnp.float32)

    # Deterministic parameter init (mimics PyTorch Conv2d default: U(-k, k))
    fan_in = C_in * KH * KW
    bound = 1.0 / (fan_in ** 0.5)
    weight = jax.random.uniform(
        kw, (C_out, C_in, KH, KW), minval=-bound, maxval=bound, dtype=jnp.float32
    )
    bias = jax.random.uniform(
        kb, (C_out,), minval=-bound, maxval=bound, dtype=jnp.float32
    )

    out = conv2d_tanh_pallas(x, weight, bias, stride=(48, 1))
    out = jax.block_until_ready(out)

    assert out.shape == (1, 128, 1, 2), out.shape

    # Reference check against plain-JAX conv + tanh
    ref = jax.lax.conv_general_dilated(
        x, weight, window_strides=(48, 1), padding="VALID",
        dimension_numbers=("NCHW", "OIHW", "NCHW"),
    ) + bias.reshape(1, C_out, 1, 1)
    ref = jnp.tanh(ref)
    assert jnp.allclose(out, ref, atol=1e-5, rtol=1e-5)

    print("KERNEL_OK")
</pallas_src>

<mosaic_0001>
module attributes {stable_mosaic.version = 11 : i64} {
  func.func @_matmul_bias_tanh_kernel(%arg0: memref<2x1554xf32, #tpu.memory_space<vmem>>, %arg1: memref<1554x128xf32, #tpu.memory_space<vmem>>, %arg2: memref<1x128xf32, #tpu.memory_space<vmem>>, %arg3: memref<2x128xf32, #tpu.memory_space<vmem>>) attributes {dimension_semantics = [], scalar_prefetch = 0 : i64, scratch_operands = 0 : i64, tpu.core_type = #tpu.core_type<tc>} {
    %c0 = arith.constant 0 : index
    %c0_0 = arith.constant 0 : index
    %0 = vector.load %arg0[%c0, %c0_0] : memref<2x1554xf32, #tpu.memory_space<vmem>>, vector<2x1554xf32>
    %c0_1 = arith.constant 0 : index
    %c0_2 = arith.constant 0 : index
    %1 = vector.load %arg1[%c0_1, %c0_2] : memref<1554x128xf32, #tpu.memory_space<vmem>>, vector<1554x128xf32>
    %cst = arith.constant dense<0.000000e+00> : vector<2x128xf32>
    %2 = tpu.matmul %0, %1, %cst {dimension_numbers = #tpu.dot_dimension_numbers<[1], [0], [0], [1], [0, 0, 1, 1], [], []>} : vector<2x1554xf32>, vector<1554x128xf32>, vector<2x128xf32> -> vector<2x128xf32>
    %c0_3 = arith.constant 0 : index
    %c0_4 = arith.constant 0 : index
    %3 = vector.load %arg2[%c0_3, %c0_4] : memref<1x128xf32, #tpu.memory_space<vmem>>, vector<1x128xf32>
    %4 = vector.broadcast %3 : vector<1x128xf32> to vector<2x128xf32>
    %5 = arith.addf %2, %4 : vector<2x128xf32>
    %6 = math.tanh %5 : vector<2x128xf32>
    %c0_5 = arith.constant 0 : index
    %c0_6 = arith.constant 0 : index
    %7 = vector.load %arg3[%c0_5, %c0_6] : memref<2x128xf32, #tpu.memory_space<vmem>>, vector<2x128xf32>
    tpu.vector_store %arg3[%c0_5, %c0_6], %6 {strides = array<i32>} : memref<2x128xf32, #tpu.memory_space<vmem>>, vector<2x128xf32>,
    return
  }
}

</mosaic_0001>

<llo_original>
// kernel: squeeze.1
$region0: #{squeeze.1}
  %s0 = inlined_call_operand.vmem [shape: f32[1,259,6,2], index: 0, kind: input, shape index: {}]
  %s1 = inlined_call_operand.vmem [shape: f32[1554,2], index: 1, kind: output, shape index: {}]
  $region1: #{squeeze.1} parent=0
    #allocation0 [shape = 'u8[53248]{0}', space=vmem, size = 0xd000, scoped, tag = 'scoped mem for output reshape']
    %v2 = vld [vmem:[%s0] sm:$0x1]
    %s3 = scalar_lea.vmem %s0, 63
    %v4 = vld [vmem:[%s3] sm:$0x2]
    %vm5 = vcmask 1041409
    %v6 = vsel %vm5, %v4, %v2
    %s7 = scalar_lea.vmem %s0, 126
    %v8 = vld [vmem:[%s7] sm:$0x4]
    %vm9 = vcmask 1042434
    %v10 = vsel %vm9, %v8, %v6
    %s11 = scalar_lea.vmem %s0, 189
    %v12 = vld [vmem:[%s11] sm:$0x8]
    %vm13 = vcmask 1043459
    %v14 = vsel %vm13, %v12, %v10
    %s15 = scalar_lea.vmem %s0, 252
    %v16 = vld [vmem:[%s15] sm:$0x10]
    %vm17 = vcmask 1044484
    %v18 = vsel %vm17, %v16, %v14
    %vm19 = vcmask 48128
    %20 = vst.msk [vmem:[#allocation0] ss:$24 sm:$0xf] %vm19, %v18
    %s21 = scalar_lea.vmem [#allocation0], 92
    %22 = vst.msk [vmem:[%s21] sm:$0x10] %vm19, %v18
    %s23 = scalar_lea.vmem %s0, 264
    %v24 = vld [vmem:[%s23] sm:$0x1]
    %s25 = scalar_lea.vmem %s0, 327
    %v26 = vld [vmem:[%s25] sm:$0x2]
    %vm27 = vcmask 1041409
    %v28 = vsel %vm27, %v26, %v24
    %s29 = scalar_lea.vmem %s0, 390
    %v30 = vld [vmem:[%s29] sm:$0x4]
    %vm31 = vcmask 1042434
    %v32 = vsel %vm31, %v30, %v28
    %s33 = scalar_lea.vmem %s0, 453
    %v34 = vld [vmem:[%s33] sm:$0x8]
    %vm35 = vcmask 1043459
    %v36 = vsel %vm35, %v34, %v32
    %s37 = scalar_lea.vmem %s0, 516
    %v38 = vld [vmem:[%s37] sm:$0x10]
    %vm39 = vcmask 1044484
    %v40 = vsel %vm39, %v38, %v36
    %vm41 = vcmask 48128
    %s42 = scalar_lea.vmem [#allocation0], 1
    %43 = vst.msk [vmem:[%s42] ss:$24 sm:$0xf] %vm41, %v40
    %s44 = scalar_lea.vmem [#allocation0], 93
    %45 = vst.msk [vmem:[%s44] sm:$0x10] %vm41, %v40
    %s46 = scalar_lea.vmem %s0, 85
    %s47 = smov 3
    %v48 = vld [vmem:[%s46] ss:$264 sm:%s47]
    %s49 = scalar_lea.vmem %s0, 4294966789
    %s50 = smov 12
    %v51 = vld [vmem:[%s49] ss:$264 sm:%s50]
    %vm52 = vcmask 1043458
    %v53 = vsel %vm52, %v51, %v48
    %s54 = scalar_lea.vmem %s0, 4294966453
    %s55 = smov 48
    %v56 = vld [vmem:[%s54] ss:$264 sm:%s55]
    %vm57 = vcmask 1045508
    %v58 = vsel %vm57, %v56, %v53
    %s59 = scalar_lea.vmem %s0, 4294965861
    %s60 = smov 192
    %v61 = vld [vmem:[%s59] ss:$264 sm:%s60]
    %vm62 = vcmask 1047558
    %v63 = vsel %vm62, %v61, %v58
    %s64 = scalar_lea.vmem %s0, 21
    %s65 = smov 3
    %v66 = vld [vmem:[%s64] ss:$264 sm:%s65]
    %s67 = scalar_lea.vmem %s0, 4294966981
    %s68 = smov 12
    %v69 = vld [vmem:[%s67] ss:$264 sm:%s68]
    %vm70 = vcmask 1043458
    %v71 = vsel %vm70, %v69, %v66
    %s72 = scalar_lea.vmem %s0, 4294966389
    %s73 = smov 48
    %v74 = vld [vmem:[%s72] ss:$264 sm:%s73]
    %vm75 = vcmask 1045508
    %v76 = vsel %vm75, %v74, %v71
    %s77 = scalar_lea.vmem %s0, 4294965797
    %s78 = smov 192
    %v79 = vld [vmem:[%s77] ss:$264 sm:%s78]
    %vm80 = vcmask 1047558
    %v81 = vsel %vm80, %v79, %v76
    %vm82 = vcmask 15360
    %v83 = vsel %vm82, %v81, %v63
    %84 = vrot.lane.b32.xlu0 %v83, 126
    %v85 = vpop.permute.xlu0 %84
    %vm86 = vcmask 31744
    %s87 = scalar_lea.vmem [#allocation0], 32
    %88 = vst.msk [vmem:[%s87] sm:$0x3] %vm86, %v85
    %s89 = scalar_lea.vmem [#allocation0], 6
    %90 = vst.msk [vmem:[%s89] sm:$0xc] %vm86, %v85
    %s91 = scalar_lea.vmem [#allocation0], 76
    %92 = vst.msk [vmem:[%s91] sm:$0x30] %vm86, %v85
    %s93 = scalar_lea.vmem [#allocation0], 50
    %94 = vst.msk [vmem:[%s93] sm:$0xc0] %vm86, %v85
    %vm95 = vcmask 1048560
    %96 = vst.msk [vmem:[#allocation0] sm:$0x3] %vm95, %v85
    %s97 = scalar_lea.vmem [#allocation0], 70
    %98 = vst.msk [vmem:[%s97] sm:$0xc] %vm95, %v85
    %s99 = scalar_lea.vmem [#allocation0], 44
    %100 = vst.msk [vmem:[%s99] sm:$0x30] %vm95, %v85
    %s101 = scalar_lea.vmem [#allocation0], 18
    %102 = vst.msk [vmem:[%s101] sm:$0xc0] %vm95, %v85
    %s103 = scalar_lea.vmem %s0, 170
    %s104 = smov 3
    %v105 = vld [vmem:[%s103] ss:$264 sm:%s104]
    %s106 = scalar_lea.vmem %s0, 4294966874
    %s107 = smov 12
    %v108 = vld [vmem:[%s106] ss:$264 sm:%s107]
    %vm109 = vcmask 1043458
    %v110 = vsel %vm109, %v108, %v105
    %s111 = scalar_lea.vmem %s0, 4294966282
    %s112 = smov 48
    %v113 = vld [vmem:[%s111] ss:$264 sm:%s112]
    %vm114 = vcmask 1045508
    %v115 = vsel %vm114, %v113, %v110
    %s116 = scalar_lea.vmem %s0, 4294965946
    %s117 = smov 192
    %v118 = vld [vmem:[%s116] ss:$264 sm:%s117]
    %vm119 = vcmask 1047558
    %v120 = vsel %vm119, %v118, %v115
    %s121 = scalar_lea.vmem %s0, 106
    %s122 = smov 3
    %v123 = vld [vmem:[%s121] ss:$264 sm:%s122]
    %s124 = scalar_lea.vmem %s0, 4294966810
    %s125 = smov 12
    %v126 = vld [vmem:[%s124] ss:$264 sm:%s125]
    %vm127 = vcmask 1043458
    %v128 = vsel %vm127, %v126, %v123
    %s129 = scalar_lea.vmem %s0, 4294966474
    %s130 = smov 48
    %v131 = vld [vmem:[%s129] ss:$264 sm:%s130]
    %vm132 = vcmask 1045508
    %v133 = vsel %vm132, %v131, %v128
    %s134 = scalar_lea.vmem %s0, 4294965882
    %s135 = smov 192
    %v136 = vld [vmem:[%s134] ss:$264 sm:%s135]
    %vm137 = vcmask 1047558
    %v138 = vsel %vm137, %v136, %v133
    %vm139 = vcmask 31744
    %v140 = vsel %vm139, %v138, %v120
    %141 = vrot.lane.b32.xlu0 %v140, 124
    %v142 = vpop.permute.xlu0 %141
    %vm143 = vcmask 15360
    %s144 = scalar_lea.vmem [#allocation0], 64
    %145 = vst.msk [vmem:[%s144] sm:$0x3] %vm143, %v142
    %s146 = scalar_lea.vmem [#allocation0], 38
    %147 = vst.msk [vmem:[%s146] sm:$0xc] %vm143, %v142
    %s148 = scalar_lea.vmem [#allocation0], 12
    %149 = vst.msk [vmem:[%s148] sm:$0x30] %vm143, %v142
    %s150 = scalar_lea.vmem [#allocation0], 82
    %151 = vst.msk [vmem:[%s150] sm:$0xc0] %vm143, %v142
    %vm152 = vcmask 1048544
    %s153 = scalar_lea.vmem [#allocation0], 32
    %154 = vst.msk [vmem:[%s153] sm:$0x3] %vm152, %v142
    %s155 = scalar_lea.vmem [#allocation0], 6
    %156 = vst.msk [vmem:[%s155] sm:$0xc] %vm152, %v142
    %s157 = scalar_lea.vmem [#allocation0], 76
    %158 = vst.msk [vmem:[%s157] sm:$0x30] %vm152, %v142
    %s159 = scalar_lea.vmem [#allocation0], 50
    %160 = vst.msk [vmem:[%s159] sm:$0xc0] %vm152, %v142
    %s161 = scalar_lea.vmem %s0, 191
    %s162 = smov 3
    %v163 = vld [vmem:[%s161] ss:$264 sm:%s162]
    %s164 = scalar_lea.vmem %s0, 4294966895
    %s165 = smov 12
    %v166 = vld [vmem:[%s164] ss:$264 sm:%s165]
    %vm167 = vcmask 1043458
    %v168 = vsel %vm167, %v166, %v163
    %s169 = scalar_lea.vmem %s0, 4294966303
    %s170 = smov 48
    %v171 = vld [vmem:[%s169] ss:$264 sm:%s170]
    %vm172 = vcmask 1045508
    %v173 = vsel %vm172, %v171, %v168
    %s174 = scalar_lea.vmem %s0, 4294965967
    %s175 = smov 192
    %v176 = vld [vmem:[%s174] ss:$264 sm:%s175]
    %vm177 = vcmask 1047558
    %v178 = vsel %vm177, %v176, %v173
    %179 = vrot.lane.b32.xlu0 %v178, 122
    %v180 = vpop.permute.xlu0 %179
    %vm181 = vcmask 1048528
    %s182 = scalar_lea.vmem [#allocation0], 64
    %183 = vst.msk [vmem:[%s182] sm:$0x3] %vm181, %v180
    %s184 = scalar_lea.vmem [#allocation0], 38
    %185 = vst.msk [vmem:[%s184] sm:$0xc] %vm181, %v180
    %s186 = scalar_lea.vmem [#allocation0], 12
    %187 = vst.msk [vmem:[%s186] sm:$0x30] %vm181, %v180
    %s188 = scalar_lea.vmem [#allocation0], 82
    %189 = vst.msk [vmem:[%s188] sm:$0xc0] %vm181, %v180
    %s190 = scalar_lea.vmem %s0, 20
    %s191 = smov 3
    %v192 = vld [vmem:[%s190] ss:$264 sm:%s191]
    %s193 = scalar_lea.vmem %s0, 4294966980
    %s194 = smov 12
    %v195 = vld [vmem:[%s193] ss:$264 sm:%s194]
    %vm196 = vcmask 1043458
    %v197 = vsel %vm196, %v195, %v192
    %s198 = scalar_lea.vmem %s0, 4294966388
    %s199 = smov 48
    %v200 = vld [vmem:[%s198] ss:$264 sm:%s199]
    %vm201 = vcmask 1045508
    %v202 = vsel %vm201, %v200, %v197
    %s203 = scalar_lea.vmem %s0, 4294965796
    %s204 = smov 192
    %v205 = vld [vmem:[%s203] ss:$264 sm:%s204]
    %vm206 = vcmask 1047558
    %v207 = vsel %vm206, %v205, %v202
    %208 = vrot.lane.b32.xlu0 %v207, 120
    %v209 = vpop.permute.xlu0 %208
    %vm210 = vcmask 1032128
    %211 = vst.msk [vmem:[#allocation0] sm:$0x3] %vm210, %v209
    %s212 = scalar_lea.vmem [#allocation0], 70
    %213 = vst.msk [vmem:[%s212] sm:$0xc] %vm210, %v209
    %s214 = scalar_lea.vmem [#allocation0], 44
    %215 = vst.msk [vmem:[%s214] sm:$0x30] %vm210, %v209
    %s216 = scalar_lea.vmem [#allocation0], 18
    %217 = vst.msk [vmem:[%s216] sm:$0xc0] %vm210, %v209
    %s218 = scalar_lea.vmem %s0, 105
    %s219 = smov 3
    %v220 = vld [vmem:[%s218] ss:$264 sm:%s219]
    %s221 = scalar_lea.vmem %s0, 4294966809
    %s222 = smov 12
    %v223 = vld [vmem:[%s221] ss:$264 sm:%s222]
    %vm224 = vcmask 1043458
    %v225 = vsel %vm224, %v223, %v220
    %s226 = scalar_lea.vmem %s0, 4294966473
    %s227 = smov 48
    %v228 = vld [vmem:[%s226] ss:$264 sm:%s227]
    %vm229 = vcmask 1045508
    %v230 = vsel %vm229, %v228, %v225
    %s231 = scalar_lea.vmem %s0, 4294965881
    %s232 = smov 192
    %v233 = vld [vmem:[%s231] ss:$264 sm:%s232]
    %vm234 = vcmask 1047558
    %v235 = vsel %vm234, %v233, %v230
    %236 = vrot.lane.b32.xlu0 %v235, 118
    %v237 = vpop.permute.xlu0 %236
    %vm238 = vcmask 1015728
    %s239 = scalar_lea.vmem [#allocation0], 32
    %240 = vst.msk [vmem:[%s239] sm:$0x3] %vm238, %v237
    %s241 = scalar_lea.vmem [#allocation0], 6
    %242 = vst.msk [vmem:[%s241] sm:$0xc] %vm238, %v237
    %s243 = scalar_lea.vmem [#allocation0], 76
    %244 = vst.msk [vmem:[%s243] sm:$0x30] %vm238, %v237
    %s245 = scalar_lea.vmem [#allocation0], 50
    %246 = vst.msk [vmem:[%s245] sm:$0xc0] %vm238, %v237
    %s247 = scalar_lea.vmem %s0, 190
    %s248 = smov 3
    %v249 = vld [vmem:[%s247] ss:$264 sm:%s248]
    %s250 = scalar_lea.vmem %s0, 4294966894
    %s251 = smov 12
    %v252 = vld [vmem:[%s250] ss:$264 sm:%s251]
    %vm253 = vcmask 1043458
    %v254 = vsel %vm253, %v252, %v249
    %s255 = scalar_lea.vmem %s0, 4294966302
    %s256 = smov 48
    %v257 = vld [vmem:[%s255] ss:$264 sm:%s256]
    %vm258 = vcmask 1045508
    %v259 = vsel %vm258, %v257, %v254
    %s260 = scalar_lea.vmem %s0, 4294965966
    %s261 = smov 192
    %v262 = vld [vmem:[%s260] ss:$264 sm:%s261]
    %vm263 = vcmask 1047558
    %v264 = vsel %vm263, %v262, %v259
    %265 = vrot.lane.b32.xlu0 %v264, 116
    %v266 = vpop.permute.xlu0 %265
    %vm267 = vcmask 999328
    %s268 = scalar_lea.vmem [#allocation0], 64
    %269 = vst.msk [vmem:[%s268] sm:$0x3] %vm267, %v266
    %s270 = scalar_lea.vmem [#allocation0], 38
    %271 = vst.msk [vmem:[%s270] sm:$0xc] %vm267, %v266
    %s272 = scalar_lea.vmem [#allocation0], 12
    %273 = vst.msk [vmem:[%s272] sm:$0x30] %vm267, %v266
    %s274 = scalar_lea.vmem [#allocation0], 82
    %275 = vst.msk [vmem:[%s274] sm:$0xc0] %vm267, %v266
    %s276 = scalar_lea.vmem %s0, 19
    %s277 = smov 3
    %v278 = vld [vmem:[%s276] ss:$264 sm:%s277]
    %s279 = scalar_lea.vmem %s0, 4294966979
    %s280 = smov 12
    %v281 = vld [vmem:[%s279] ss:$264 sm:%s280]
    %vm282 = vcmask 1043458
    %v283 = vsel %vm282, %v281, %v278
    %s284 = scalar_lea.vmem %s0, 4294966387
    %s285 = smov 48
    %v286 = vld [vmem:[%s284] ss:$264 sm:%s285]
    %vm287 = vcmask 1045508
    %v288 = vsel %vm287, %v286, %v283
    %s289 = scalar_lea.vmem %s0, 4294965795
    %s290 = smov 192
    %v291 = vld [vmem:[%s289] ss:$264 sm:%s290]
    %vm292 = vcmask 1047558
    %v293 = vsel %vm292, %v291, %v288
    %294 = vrot.lane.b32.xlu0 %v293, 114
    %v295 = vpop.permute.xlu0 %294
    %vm296 = vcmask 982928
    %297 = vst.msk [vmem:[#allocation0] sm:$0x3] %vm296, %v295
    %s298 = scalar_lea.vmem [#allocation0], 70
    %299 = vst.msk [vmem:[%s298] sm:$0xc] %vm296, %v295
    %s300 = scalar_lea.vmem [#allocation0], 44
    %301 = vst.msk [vmem:[%s300] sm:$0x30] %vm296, %v295
    %s302 = scalar_lea.vmem [#allocation0], 18
    %303 = vst.msk [vmem:[%s302] sm:$0xc0] %vm296, %v295
    %s304 = scalar_lea.vmem %s0, 104
    %s305 = smov 3
    %v306 = vld [vmem:[%s304] ss:$264 sm:%s305]
    %s307 = scalar_lea.vmem %s0, 4294966808
    %s308 = smov 12
    %v309 = vld [vmem:[%s307] ss:$264 sm:%s308]
    %vm310 = vcmask 1043458
    %v311 = vsel %vm310, %v309, %v306
    %s312 = scalar_lea.vmem %s0, 4294966472
    %s313 = smov 48
    %v314 = vld [vmem:[%s312] ss:$264 sm:%s313]
    %vm315 = vcmask 1045508
    %v316 = vsel %vm315, %v314, %v311
    %s317 = scalar_lea.vmem %s0, 4294965880
    %s318 = smov 192
    %v319 = vld [vmem:[%s317] ss:$264 sm:%s318]
    %vm320 = vcmask 1047558
    %v321 = vsel %vm320, %v319, %v316
    %322 = vrot.lane.b32.xlu0 %v321, 112
    %v323 = vpop.permute.xlu0 %322
    %vm324 = vcmask 966528
    %s325 = scalar_lea.vmem [#allocation0], 32
    %326 = vst.msk [vmem:[%s325] sm:$0x3] %vm324, %v323
    %s327 = scalar_lea.vmem [#allocation0], 6
    %328 = vst.msk [vmem:[%s327] sm:$0xc] %vm324, %v323
    %s329 = scalar_lea.vmem [#allocation0], 76
    %330 = vst.msk [vmem:[%s329] sm:$0x30] %vm324, %v323
    %s331 = scalar_lea.vmem [#allocation0], 50
    %332 = vst.msk [vmem:[%s331] sm:$0xc0] %vm324, %v323
    %s333 = scalar_lea.vmem %s0, 189
    %s334 = smov 3
    %v335 = vld [vmem:[%s333] ss:$264 sm:%s334]
    %s336 = scalar_lea.vmem %s0, 4294966893
    %s337 = smov 12
    %v338 = vld [vmem:[%s336] ss:$264 sm:%s337]
    %vm339 = vcmask 1043458
    %v340 = vsel %vm339, %v338, %v335
    %s341 = scalar_lea.vmem %s0, 4294966301
    %s342 = smov 48
    %v343 = vld [vmem:[%s341] ss:$264 sm:%s342]
    %vm344 = vcmask 1045508
    %v345 = vsel %vm344, %v343, %v340
    %s346 = scalar_lea.vmem %s0, 4294965965
    %s347 = smov 192
    %v348 = vld [vmem:[%s346] ss:$264 sm:%s347]
    %vm349 = vcmask 1047558
    %v350 = vsel %vm349, %v348, %v345
    %351 = vrot.lane.b32.xlu0 %v350, 110
    %v352 = vpop.permute.xlu0 %351
    %vm353 = vcmask 950128
    %s354 = scalar_lea.vmem [#allocation0], 64
    %355 = vst.msk [vmem:[%s354] sm:$0x3] %vm353, %v352
    %s356 = scalar_lea.vmem [#allocation0], 38
    %357 = vst.msk [vmem:[%s356] sm:$0xc] %vm353, %v352
    %s358 = scalar_lea.vmem [#allocation0], 12
    %359 = vst.msk [vmem:[%s358] sm:$0x30] %vm353, %v352
    %s360 = scalar_lea.vmem [#allocation0], 82
    %361 = vst.msk [vmem:[%s360] sm:$0xc0] %vm353, %v352
    %s362 = scalar_lea.vmem %s0, 18
    %s363 = smov 3
    %v364 = vld [vmem:[%s362] ss:$264 sm:%s363]
    %s365 = scalar_lea.vmem %s0, 4294966978
    %s366 = smov 12
    %v367 = vld [vmem:[%s365] ss:$264 sm:%s366]
    %vm368 = vcmask 1043458
    %v369 = vsel %vm368, %v367, %v364
    %s370 = scalar_lea.vmem %s0, 4294966386
    %s371 = smov 48
    %v372 = vld [vmem:[%s370] ss:$264 sm:%s371]
    %vm373 = vcmask 1045508
    %v374 = vsel %vm373, %v372, %v369
    %s375 = scalar_lea.vmem %s0, 4294965794
    %s376 = smov 192
    %v377 = vld [vmem:[%s375] ss:$264 sm:%s376]
    %vm378 = vcmask 1047558
    %v379 = vsel %vm378, %v377, %v374
    %380 = vrot.lane.b32.xlu0 %v379, 108
    %v381 = vpop.permute.xlu0 %380
    %vm382 = vcmask 933728
    %383 = vst.msk [vmem:[#allocation0] sm:$0x3] %vm382, %v381
    %s384 = scalar_lea.vmem [#allocation0], 70
    %385 = vst.msk [vmem:[%s384] sm:$0xc] %vm382, %v381
    %s386 = scalar_lea.vmem [#allocation0], 44
    %387 = vst.msk [vmem:[%s386] sm:$0x30] %vm382, %v381
    %s388 = scalar_lea.vmem [#allocation0], 18
    %389 = vst.msk [vmem:[%s388] sm:$0xc0] %vm382, %v381
    %s390 = scalar_lea.vmem %s0, 103
    %s391 = smov 3
    %v392 = vld [vmem:[%s390] ss:$264 sm:%s391]
    %s393 = scalar_lea.vmem %s0, 4294966807
    %s394 = smov 12
    %v395 = vld [vmem:[%s393] ss:$264 sm:%s394]
    %vm396 = vcmask 1043458
    %v397 = vsel %vm396, %v395, %v392
    %s398 = scalar_lea.vmem %s0, 4294966471
    %s399 = smov 48
    %v400 = vld [vmem:[%s398] ss:$264 sm:%s399]
    %vm401 = vcmask 1045508
    %v402 = vsel %vm401, %v400, %v397
    %s403 = scalar_lea.vmem %s0, 4294965879
    %s404 = smov 192
    %v405 = vld [vmem:[%s403] ss:$264 sm:%s404]
    %vm406 = vcmask 1047558
    %v407 = vsel %vm406, %v405, %v402
    %408 = vrot.lane.b32.xlu0 %v407, 106
    %v409 = vpop.permute.xlu0 %408
    %vm410 = vcmask 917328
    %s411 = scalar_lea.vmem [#allocation0], 32
    %412 = vst.msk [vmem:[%s411] sm:$0x3] %vm410, %v409
    %s413 = scalar_lea.vmem [#allocation0], 6
    %414 = vst.msk [vmem:[%s413] sm:$0xc] %vm410, %v409
    %s415 = scalar_lea.vmem [#allocation0], 76
    %416 = vst.msk [vmem:[%s415] sm:$0x30] %vm410, %v409
    %s417 = scalar_lea.vmem [#allocation0], 50
    %418 = vst.msk [vmem:[%s417] sm:$0xc0] %vm410, %v409
    %s419 = scalar_lea.vmem %s0, 188
    %s420 = smov 3
    %v421 = vld [vmem:[%s419] ss:$264 sm:%s420]
    %s422 = scalar_lea.vmem %s0, 4294966892
    %s423 = smov 12
    %v424 = vld [vmem:[%s422] ss:$264 sm:%s423]
    %vm425 = vcmask 1043458
    %v426 = vsel %vm425, %v424, %v421
    %s427 = scalar_lea.vmem %s0, 4294966300
    %s428 = smov 48
    %v429 = vld [vmem:[%s427] ss:$264 sm:%s428]
    %vm430 = vcmask 1045508
    %v431 = vsel %vm430, %v429, %v426
    %s432 = scalar_lea.vmem %s0, 4294965964
    %s433 = smov 192
    %v434 = vld [vmem:[%s432] ss:$264 sm:%s433]
    %vm435 = vcmask 1047558
    %v436 = vsel %vm435, %v434, %v431
    %437 = vrot.lane.b32.xlu0 %v436, 104
    %v438 = vpop.permute.xlu0 %437
    %vm439 = vcmask 900928
    %s440 = scalar_lea.vmem [#allocation0], 64
    %441 = vst.msk [vmem:[%s440] sm:$0x3] %vm439, %v438
    %s442 = scalar_lea.vmem [#allocation0], 38
    %443 = vst.msk [vmem:[%s442] sm:$0xc] %vm439, %v438
    %s444 = scalar_lea.vmem [#allocation0], 12
    %445 = vst.msk [vmem:[%s444] sm:$0x30] %vm439, %v438
    %s446 = scalar_lea.vmem [#allocation0], 82
    %447 = vst.msk [vmem:[%s446] sm:$0xc0] %vm439, %v438
    %s448 = scalar_lea.vmem %s0, 17
    %s449 = smov 3
    %v450 = vld [vmem:[%s448] ss:$264 sm:%s449]
    %s451 = scalar_lea.vmem %s0, 4294966977
    %s452 = smov 12
    %v453 = vld [vmem:[%s451] ss:$264 sm:%s452]
    %vm454 = vcmask 1043458
    %v455 = vsel %vm454, %v453, %v450
    %s456 = scalar_lea.vmem %s0, 4294966385
    %s457 = smov 48
    %v458 = vld [vmem:[%s456] ss:$264 sm:%s457]
    %vm459 = vcmask 1045508
    %v460 = vsel %vm459, %v458, %v455
    %s461 = scalar_lea.vmem %s0, 4294965793
    %s462 = smov 192
    %v463 = vld [vmem:[%s461] ss:$264 sm:%s462]
    %vm464 = vcmask 1047558
    %v465 = vsel %vm464, %v463, %v460
    %466 = vrot.lane.b32.xlu0 %v465, 102
    %v467 = vpop.permute.xlu0 %466
    %vm468 = vcmask 884528
    %469 = vst.msk [vmem:[#allocation0] sm:$0x3] %vm468, %v467
    %s470 = scalar_lea.vmem [#allocation0], 70
    %471 = vst.msk [vmem:[%s470] sm:$0xc] %vm468, %v467
    %s472 = scalar_lea.vmem [#allocation0], 44
    %473 = vst.msk [vmem:[%s472] sm:$0x30] %vm468, %v467
    %s474 = scalar_lea.vmem [#allocation0], 18
    %475 = vst.msk [vmem:[%s474] sm:$0xc0] %vm468, %v467
    %s476 = scalar_lea.vmem %s0, 102
    %s477 = smov 3
    %v478 = vld [vmem:[%s476] ss:$264 sm:%s477]
    %s479 = scalar_lea.vmem %s0, 4294966806
    %s480 = smov 12
    %v481 = vld [vmem:[%s479] ss:$264 sm:%s480]
    %vm482 = vcmask 1043458
    %v483 = vsel %vm482, %v481, %v478
    %s484 = scalar_lea.vmem %s0, 4294966470
    %s485 = smov 48
    %v486 = vld [vmem:[%s484] ss:$264 sm:%s485]
    %vm487 = vcmask 1045508
    %v488 = vsel %vm487, %v486, %v483
    %s489 = scalar_lea.vmem %s0, 4294965878
    %s490 = smov 192
    %v491 = vld [vmem:[%s489] ss:$264 sm:%s490]
    %vm492 = vcmask 1047558
    %v493 = vsel %vm492, %v491, %v488
    %494 = vrot.lane.b32.xlu0 %v493, 100
    %v495 = vpop.permute.xlu0 %494
    %vm496 = vcmask 868128
    %s497 = scalar_lea.vmem [#allocation0], 32
    %498 = vst.msk [vmem:[%s497] sm:$0x3] %vm496, %v495
    %s499 = scalar_lea.vmem [#allocation0], 6
    %500 = vst.msk [vmem:[%s499] sm:$0xc] %vm496, %v495
    %s501 = scalar_lea.vmem [#allocation0], 76
    %502 = vst.msk [vmem:[%s501] sm:$0x30] %vm496, %v495
    %s503 = scalar_lea.vmem [#allocation0], 50
    %504 = vst.msk [vmem:[%s503] sm:$0xc0] %vm496, %v495
    %s505 = scalar_lea.vmem %s0, 187
    %s506 = smov 3
    %v507 = vld [vmem:[%s505] ss:$264 sm:%s506]
    %s508 = scalar_lea.vmem %s0, 4294966891
    %s509 = smov 12
    %v510 = vld [vmem:[%s508] ss:$264 sm:%s509]
    %vm511 = vcmask 1043458
    %v512 = vsel %vm511, %v510, %v507
    %s513 = scalar_lea.vmem %s0, 4294966299
    %s514 = smov 48
    %v515 = vld [vmem:[%s513] ss:$264 sm:%s514]
    %vm516 = vcmask 1045508
    %v517 = vsel %vm516, %v515, %v512
    %s518 = scalar_lea.vmem %s0, 4294965963
    %s519 = smov 192
    %v520 = vld [vmem:[%s518] ss:$264 sm:%s519]
    %vm521 = vcmask 1047558
    %v522 = vsel %vm521, %v520, %v517
    %523 = vrot.lane.b32.xlu0 %v522, 98
    %v524 = vpop.permute.xlu0 %523
    %vm525 = vcmask 851728
    %s526 = scalar_lea.vmem [#allocation0], 64
    %527 = vst.msk [vmem:[%s526] sm:$0x3] %vm525, %v524
    %s528 = scalar_lea.vmem [#allocation0], 38
    %529 = vst.msk [vmem:[%s528] sm:$0xc] %vm525, %v524
    %s530 = scalar_lea.vmem [#allocation0], 12
    %531 = vst.msk [vmem:[%s530] sm:$0x30] %vm525, %v524
    %s532 = scalar_lea.vmem [#allocation0], 82
    %533 = vst.msk [vmem:[%s532] sm:$0xc0] %vm525, %v524
    %s534 = scalar_lea.vmem %s0, 16
    %s535 = smov 3
    %v536 = vld [vmem:[%s534] ss:$264 sm:%s535]
    %s537 = scalar_lea.vmem %s0, 4294966976
    %s538 = smov 12
    %v539 = vld [vmem:[%s537] ss:$264 sm:%s538]
    %vm540 = vcmask 1043458
    %v541 = vsel %vm540, %v539, %v536
    %s542 = scalar_lea.vmem %s0, 4294966384
    %s543 = smov 48
    %v544 = vld [vmem:[%s542] ss:$264 sm:%s543]
    %vm545 = vcmask 1045508
    %v546 = vsel %vm545, %v544, %v541
    %s547 = scalar_lea.vmem %s0, 4294965792
    %s548 = smov 192
    %v549 = vld [vmem:[%s547] ss:$264 sm:%s548]
    %vm550 = vcmask 1047558
    %v551 = vsel %vm550, %v549, %v546
    %552 = vrot.lane.b32.xlu0 %v551, 96
    %v553 = vpop.permute.xlu0 %552
    %vm554 = vcmask 835328
    %555 = vst.msk [vmem:[#allocation0] sm:$0x3] %vm554, %v553
    %s556 = scalar_lea.vmem [#allocation0], 70
    %557 = vst.msk [vmem:[%s556] sm:$0xc] %vm554, %v553
    %s558 = scalar_lea.vmem [#allocation0], 44
    %559 = vst.msk [vmem:[%s558] sm:$0x30] %vm554, %v553
    %s560 = scalar_lea.vmem [#allocation0], 18
    %561 = vst.msk [vmem:[%s560] sm:$0xc0] %vm554, %v553
    %s562 = scalar_lea.vmem %s0, 101
    %s563 = smov 3
    %v564 = vld [vmem:[%s562] ss:$264 sm:%s563]
    %s565 = scalar_lea.vmem %s0, 4294966805
    %s566 = smov 12
    %v567 = vld [vmem:[%s565] ss:$264 sm:%s566]
    %vm568 = vcmask 1043458
    %v569 = vsel %vm568, %v567, %v564
    %s570 = scalar_lea.vmem %s0, 4294966469
    %s571 = smov 48
    %v572 = vld [vmem:[%s570] ss:$264 sm:%s571]
    %vm573 = vcmask 1045508
    %v574 = vsel %vm573, %v572, %v569
    %s575 = scalar_lea.vmem %s0, 4294965877
    %s576 = smov 192
    %v577 = vld [vmem:[%s575] ss:$264 sm:%s576]
    %vm578 = vcmask 1047558
    %v579 = vsel %vm578, %v577, %v574
    %580 = vrot.lane.b32.xlu0 %v579, 94
    %v581 = vpop.permute.xlu0 %580
    %vm582 = vcmask 818928
    %s583 = scalar_lea.vmem [#allocation0], 32
    %584 = vst.msk [vmem:[%s583] sm:$0x3] %vm582, %v581
    %s585 = scalar_lea.vmem [#allocation0], 6
    %586 = vst.msk [vmem:[%s585] sm:$0xc] %vm582, %v581
    %s587 = scalar_lea.vmem [#allocation0], 76
    %588 = vst.msk [vmem:[%s587] sm:$0x30] %vm582, %v581
    %s589 = scalar_lea.vmem [#allocation0], 50
    %590 = vst.msk [vmem:[%s589] sm:$0xc0] %vm582, %v581
    %s591 = scalar_lea.vmem %s0, 186
    %s592 = smov 3
    %v593 = vld [vmem:[%s591] ss:$264 sm:%s592]
    %s594 = scalar_lea.vmem %s0, 4294966890
    %s595 = smov 12
    %v596 = vld [vmem:[%s594] ss:$264 sm:%s595]
    %vm597 = vcmask 1043458
    %v598 = vsel %vm597, %v596, %v593
    %s599 = scalar_lea.vmem %s0, 4294966298
    %s600 = smov 48
    %v601 = vld [vmem:[%s599] ss:$264 sm:%s600]
    %vm602 = vcmask 1045508
    %v603 = vsel %vm602, %v601, %v598
    %s604 = scalar_lea.vmem %s0, 4294965962
    %s605 = smov 192
    %v606 = vld [vmem:[%s604] ss:$264 sm:%s605]
    %vm607 = vcmask 1047558
    %v608 = vsel %vm607, %v606, %v603
    %609 = vrot.lane.b32.xlu0 %v608, 92
    %v610 = vpop.permute.xlu0 %609
    %vm611 = vcmask 802528
    %s612 = scalar_lea.vmem [#allocation0], 64
    %613 = vst.msk [vmem:[%s612] sm:$0x3] %vm611, %v610
    %s614 = scalar_lea.vmem [#allocation0], 38
    %615 = vst.msk [vmem:[%s614] sm:$0xc] %vm611, %v610
    %s616 = scalar_lea.vmem [#allocation0], 12
    %617 = vst.msk [vmem:[%s616] sm:$0x30] %vm611, %v610
    %s618 = scalar_lea.vmem [#allocation0], 82
    %619 = vst.msk [vmem:[%s618] sm:$0xc0] %vm611, %v610
    %s620 = scalar_lea.vmem %s0, 15
    %s621 = smov 3
    %v622 = vld [vmem:[%s620] ss:$264 sm:%s621]
    %s623 = scalar_lea.vmem %s0, 4294966975
    %s624 = smov 12
    %v625 = vld [vmem:[%s623] ss:$264 sm:%s624]
    %vm626 = vcmask 1043458
    %v627 = vsel %vm626, %v625, %v622
    %s628 = scalar_lea.vmem %s0, 4294966383
    %s629 = smov 48
    %v630 = vld [vmem:[%s628] ss:$264 sm:%s629]
    %vm631 = vcmask 1045508
    %v632 = vsel %vm631, %v630, %v627
    %s633 = scalar_lea.vmem %s0, 4294965791
    %s634 = smov 192
    %v635 = vld [vmem:[%s633] ss:$264 sm:%s634]
    %vm636 = vcmask 1047558
    %v637 = vsel %vm636, %v635, %v632
    %638 = vrot.lane.b32.xlu0 %v637, 90
    %v639 = vpop.permute.xlu0 %638
    %vm640 = vcmask 786128
    %641 = vst.msk [vmem:[#allocation0] sm:$0x3] %vm640, %v639
    %s642 = scalar_lea.vmem [#allocation0], 70
    %643 = vst.msk [vmem:[%s642] sm:$0xc] %vm640, %v639
    %s644 = scalar_lea.vmem [#allocation0], 44
    %645 = vst.msk [vmem:[%s644] sm:$0x30] %vm640, %v639
    %s646 = scalar_lea.vmem [#allocation0], 18
    %647 = vst.msk [vmem:[%s646] sm:$0xc0] %vm640, %v639
    %s648 = scalar_lea.vmem %s0, 100
    %s649 = smov 3
    %v650 = vld [vmem:[%s648] ss:$264 sm:%s649]
    %s651 = scalar_lea.vmem %s0, 4294966804
    %s652 = smov 12
    %v653 = vld [vmem:[%s651] ss:$264 sm:%s652]
    %vm654 = vcmask 1043458
    %v655 = vsel %vm654, %v653, %v650
    %s656 = scalar_lea.vmem %s0, 4294966468
    %s657 = smov 48
    %v658 = vld [vmem:[%s656] ss:$264 sm:%s657]
    %vm659 = vcmask 1045508
    %v660 = vsel %vm659, %v658, %v655
    %s661 = scalar_lea.vmem %s0, 4294965876
    %s662 = smov 192
    %v663 = vld [vmem:[%s661] ss:$264 sm:%s662]
    %vm664 = vcmask 1047558
    %v665 = vsel %vm664, %v663, %v660
    %666 = vrot.lane.b32.xlu0 %v665, 88
    %v667 = vpop.permute.xlu0 %666
    %vm668 = vcmask 769728
    %s669 = scalar_lea.vmem [#allocation0], 32
    %670 = vst.msk [vmem:[%s669] sm:$0x3] %vm668, %v667
    %s671 = scalar_lea.vmem [#allocation0], 6
    %672 = vst.msk [vmem:[%s671] sm:$0xc] %vm668, %v667
    %s673 = scalar_lea.vmem [#allocation0], 76
    %674 = vst.msk [vmem:[%s673] sm:$0x30] %vm668, %v667
    %s675 = scalar_lea.vmem [#allocation0], 50
    %676 = vst.msk [vmem:[%s675] sm:$0xc0] %vm668, %v667
    %s677 = scalar_lea.vmem %s0, 185
    %s678 = smov 3
    %v679 = vld [vmem:[%s677] ss:$264 sm:%s678]
    %s680 = scalar_lea.vmem %s0, 4294966889
    %s681 = smov 12
    %v682 = vld [vmem:[%s680] ss:$264 sm:%s681]
    %vm683 = vcmask 1043458
    %v684 = vsel %vm683, %v682, %v679
    %s685 = scalar_lea.vmem %s0, 4294966297
    %s686 = smov 48
    %v687 = vld [vmem:[%s685] ss:$264 sm:%s686]
    %vm688 = vcmask 1045508
    %v689 = vsel %vm688, %v687, %v684
    %s690 = scalar_lea.vmem %s0, 4294965961
    %s691 = smov 192
    %v692 = vld [vmem:[%s690] ss:$264 sm:%s691]
    %vm693 = vcmask 1047558
    %v694 = vsel %vm693, %v692, %v689
    %695 = vrot.lane.b32.xlu0 %v694, 86
    %v696 = vpop.permute.xlu0 %695
    %vm697 = vcmask 753328
    %s698 = scalar_lea.vmem [#allocation0], 64
    %699 = vst.msk [vmem:[%s698] sm:$0x3] %vm697, %v696
    %s700 = scalar_lea.vmem [#allocation0], 38
    %701 = vst.msk [vmem:[%s700] sm:$0xc] %vm697, %v696
    %s702 = scalar_lea.vmem [#allocation0], 12
    %703 = vst.msk [vmem:[%s702] sm:$0x30] %vm697, %v696
    %s704 = scalar_lea.vmem [#allocation0], 82
    %705 = vst.msk [vmem:[%s704] sm:$0xc0] %vm697, %v696
    %s706 = scalar_lea.vmem %s0, 14
    %s707 = smov 3
    %v708 = vld [vmem:[%s706] ss:$264 sm:%s707]
    %s709 = scalar_lea.vmem %s0, 4294966974
    %s710 = smov 12
    %v711 = vld [vmem:[%s709] ss:$264 sm:%s710]
    %vm712 = vcmask 1043458
    %v713 = vsel %vm712, %v711, %v708
    %s714 = scalar_lea.vmem %s0, 4294966382
    %s715 = smov 48
    %v716 = vld [vmem:[%s714] ss:$264 sm:%s715]
    %vm717 = vcmask 1045508
    %v718 = vsel %vm717, %v716, %v713
    %s719 = scalar_lea.vmem %s0, 4294965790
    %s720 = smov 192
    %v721 = vld [vmem:[%s719] ss:$264 sm:%s720]
    %vm722 = vcmask 1047558
    %v723 = vsel %vm722, %v721, %v718
    %724 = vrot.lane.b32.xlu0 %v723, 84
    %v725 = vpop.permute.xlu0 %724
    %vm726 = vcmask 736928
    %727 = vst.msk [vmem:[#allocation0] sm:$0x3] %vm726, %v725
    %s728 = scalar_lea.vmem [#allocation0], 70
    %729 = vst.msk [vmem:[%s728] sm:$0xc] %vm726, %v725
    %s730 = scalar_lea.vmem [#allocation0], 44
    %731 = vst.msk [vmem:[%s730] sm:$0x30] %vm726, %v725
    %s732 = scalar_lea.vmem [#allocation0], 18
    %733 = vst.msk [vmem:[%s732] sm:$0xc0] %vm726, %v725
    %s734 = scalar_lea.vmem %s0, 99
    %s735 = smov 3
    %v736 = vld [vmem:[%s734] ss:$264 sm:%s735]
    %s737 = scalar_lea.vmem %s0, 4294966803
    %s738 = smov 12
    %v739 = vld [vmem:[%s737] ss:$264 sm:%s738]
    %vm740 = vcmask 1043458
    %v741 = vsel %vm740, %v739, %v736
    %s742 = scalar_lea.vmem %s0, 4294966467
    %s743 = smov 48
    %v744 = vld [vmem:[%s742] ss:$264 sm:%s743]
    %vm745 = vcmask 1045508
    %v746 = vsel %vm745, %v744, %v741
    %s747 = scalar_lea.vmem %s0, 4294965875
    %s748 = smov 192
    %v749 = vld [vmem:[%s747] ss:$264 sm:%s748]
    %vm750 = vcmask 1047558
    %v751 = vsel %vm750, %v749, %v746
    %752 = vrot.lane.b32.xlu0 %v751, 82
    %v753 = vpop.permute.xlu0 %752
    %vm754 = vcmask 720528
    %s755 = scalar_lea.vmem [#allocation0], 32
    %756 = vst.msk [vmem:[%s755] sm:$0x3] %vm754, %v753
    %s757 = scalar_lea.vmem [#allocation0], 6
    %758 = vst.msk [vmem:[%s757] sm:$0xc] %vm754, %v753
    %s759 = scalar_lea.vmem [#allocation0], 76
    %760 = vst.msk [vmem:[%s759] sm:$0x30] %vm754, %v753
    %s761 = scalar_lea.vmem [#allocation0], 50
    %762 = vst.msk [vmem:[%s761] sm:$0xc0] %vm754, %v753
    %s763 = scalar_lea.vmem %s0, 184
    %s764 = smov 3
    %v765 = vld [vmem:[%s763] ss:$264 sm:%s764]
    %s766 = scalar_lea.vmem %s0, 4294966888
    %s767 = smov 12
    %v768 = vld [vmem:[%s766] ss:$264 sm:%s767]
    %vm769 = vcmask 1043458
    %v770 = vsel %vm769, %v768, %v765
    %s771 = scalar_lea.vmem %s0, 4294966296
    %s772 = smov 48
    %v773 = vld [vmem:[%s771] ss:$264 sm:%s772]
    %vm774 = vcmask 1045508
    %v775 = vsel %vm774, %v773, %v770
    %s776 = scalar_lea.vmem %s0, 4294965960
    %s777 = smov 192
    %v778 = vld [vmem:[%s776] ss:$264 sm:%s777]
    %vm779 = vcmask 1047558
    %v780 = vsel %vm779, %v778, %v775
    %781 = vrot.lane.b32.xlu0 %v780, 80
    %v782 = vpop.permute.xlu0 %781
    %vm783 = vcmask 704128
    %s784 = scalar_lea.vmem [#allocation0], 64
    %785 = vst.msk [vmem:[%s784] sm:$0x3] %vm783, %v782
    %s786 = scalar_lea.vmem [#allocation0], 38
    %787 = vst.msk [vmem:[%s786] sm:$0xc] %vm783, %v782
    %s788 = scalar_lea.vmem [#allocation0], 12
    %789 = vst.msk [vmem:[%s788] sm:$0x30] %vm783, %v782
    %s790 = scalar_lea.vmem [#allocation0], 82
    %791 = vst.msk [vmem:[%s790] sm:$0xc0] %vm783, %v782
    %s792 = scalar_lea.vmem %s0, 13
    %s793 = smov 3
    %v794 = vld [vmem:[%s792] ss:$264 sm:%s793]
    %s795 = scalar_lea.vmem %s0, 4294966973
    %s796 = smov 12
    %v797 = vld [vmem:[%s795] ss:$264 sm:%s796]
    %vm798 = vcmask 1043458
    %v799 = vsel %vm798, %v797, %v794
    %s800 = scalar_lea.vmem %s0, 4294966381
    %s801 = smov 48
    %v802 = vld [vmem:[%s800] ss:$264 sm:%s801]
    %vm803 = vcmask 1045508
    %v804 = vsel %vm803, %v802, %v799
    %s805 = scalar_lea.vmem %s0, 4294965789
    %s806 = smov 192
    %v807 = vld [vmem:[%s805] ss:$264 sm:%s806]
    %vm808 = vcmask 1047558
    %v809 = vsel %vm808, %v807, %v804
    %810 = vrot.lane.b32.xlu0 %v809, 78
    %v811 = vpop.permute.xlu0 %810
    %vm812 = vcmask 687728
    %813 = vst.msk [vmem:[#allocation0] sm:$0x3] %vm812, %v811
    %s814 = scalar_lea.vmem [#allocation0], 70
    %815 = vst.msk [vmem:[%s814] sm:$0xc] %vm812, %v811
    %s816 = scalar_lea.vmem [#allocation0], 44
    %817 = vst.msk [vmem:[%s816] sm:$0x30] %vm812, %v811
    %s818 = scalar_lea.vmem [#allocation0], 18
    %819 = vst.msk [vmem:[%s818] sm:$0xc0] %vm812, %v811
    %s820 = scalar_lea.vmem %s0, 98
    %s821 = smov 3
    %v822 = vld [vmem:[%s820] ss:$264 sm:%s821]
    %s823 = scalar_lea.vmem %s0, 4294966802
    %s824 = smov 12
    %v825 = vld [vmem:[%s823] ss:$264 sm:%s824]
    %vm826 = vcmask 1043458
    %v827 = vsel %vm826, %v825, %v822
    %s828 = scalar_lea.vmem %s0, 4294966466
    %s829 = smov 48
    %v830 = vld [vmem:[%s828] ss:$264 sm:%s829]
    %vm831 = vcmask 1045508
    %v832 = vsel %vm831, %v830, %v827
    %s833 = scalar_lea.vmem %s0, 4294965874
    %s834 = smov 192
    %v835 = vld [vmem:[%s833] ss:$264 sm:%s834]
    %vm836 = vcmask 1047558
    %v837 = vsel %vm836, %v835, %v832
    %838 = vrot.lane.b32.xlu0 %v837, 76
    %v839 = vpop.permute.xlu0 %838
    %vm840 = vcmask 671328
    %s841 = scalar_lea.vmem [#allocation0], 32
    %842 = vst.msk [vmem:[%s841] sm:$0x3] %vm840, %v839
    %s843 = scalar_lea.vmem [#allocation0], 6
    %844 = vst.msk [vmem:[%s843] sm:$0xc] %vm840, %v839
    %s845 = scalar_lea.vmem [#allocation0], 76
    %846 = vst.msk [vmem:[%s845] sm:$0x30] %vm840, %v839
    %s847 = scalar_lea.vmem [#allocation0], 50
    %848 = vst.msk [vmem:[%s847] sm:$0xc0] %vm840, %v839
    %s849 = scalar_lea.vmem %s0, 183
    %s850 = smov 3
    %v851 = vld [vmem:[%s849] ss:$264 sm:%s850]
    %s852 = scalar_lea.vmem %s0, 4294966887
    %s853 = smov 12
    %v854 = vld [vmem:[%s852] ss:$264 sm:%s853]
    %vm855 = vcmask 1043458
    %v856 = vsel %vm855, %v854, %v851
    %s857 = scalar_lea.vmem %s0, 4294966295
    %s858 = smov 48
    %v859 = vld [vmem:[%s857] ss:$264 sm:%s858]
    %vm860 = vcmask 1045508
    %v861 = vsel %vm860, %v859, %v856
    %s862 = scalar_lea.vmem %s0, 4294965959
    %s863 = smov 192
    %v864 = vld [vmem:[%s862] ss:$264 sm:%s863]
    %vm865 = vcmask 1047558
    %v866 = vsel %vm865, %v864, %v861
    %867 = vrot.lane.b32.xlu0 %v866, 74
    %v868 = vpop.permute.xlu0 %867
    %vm869 = vcmask 654928
    %s870 = scalar_lea.vmem [#allocation0], 64
    %871 = vst.msk [vmem:[%s870] sm:$0x3] %vm869, %v868
    %s872 = scalar_lea.vmem [#allocation0], 38
    %873 = vst.msk [vmem:[%s872] sm:$0xc] %vm869, %v868
    %s874 = scalar_lea.vmem [#allocation0], 12
    %875 = vst.msk [vmem:[%s874] sm:$0x30] %vm869, %v868
    %s876 = scalar_lea.vmem [#allocation0], 82
    %877 = vst.msk [vmem:[%s876] sm:$0xc0] %vm869, %v868
    %s878 = scalar_lea.vmem %s0, 12
    %s879 = smov 3
    %v880 = vld [vmem:[%s878] ss:$264 sm:%s879]
    %s881 = scalar_lea.vmem %s0, 4294966972
    %s882 = smov 12
    %v883 = vld [vmem:[%s881] ss:$264 sm:%s882]
    %vm884 = vcmask 1043458
    %v885 = vsel %vm884, %v883, %v880
    %s886 = scalar_lea.vmem %s0, 4294966380
    %s887 = smov 48
    %v888 = vld [vmem:[%s886] ss:$264 sm:%s887]
    %vm889 = vcmask 1045508
    %v890 = vsel %vm889, %v888, %v885
    %s891 = scalar_lea.vmem %s0, 4294965788
    %s892 = smov 192
    %v893 = vld [vmem:[%s891] ss:$264 sm:%s892]
    %vm894 = vcmask 1047558
    %v895 = vsel %vm894, %v893, %v890
    %896 = vrot.lane.b32.xlu0 %v895, 72
    %v897 = vpop.permute.xlu0 %896
    %vm898 = vcmask 638528
    %899 = vst.msk [vmem:[#allocation0] sm:$0x3] %vm898, %v897
    %s900 = scalar_lea.vmem [#allocation0], 70
    %901 = vst.msk [vmem:[%s900] sm:$0xc] %vm898, %v897
    %s902 = scalar_lea.vmem [#allocation0], 44
    %903 = vst.msk [vmem:[%s902] sm:$0x30] %vm898, %v897
    %s904 = scalar_lea.vmem [#allocation0], 18
    %905 = vst.msk [vmem:[%s904] sm:$0xc0] %vm898, %v897
    %s906 = scalar_lea.vmem %s0, 97
    %s907 = smov 3
    %v908 = vld [vmem:[%s906] ss:$264 sm:%s907]
    %s909 = scalar_lea.vmem %s0, 4294966801
    %s910 = smov 12
    %v911 = vld [vmem:[%s909] ss:$264 sm:%s910]
    %vm912 = vcmask 1043458
    %v913 = vsel %vm912, %v911, %v908
    %s914 = scalar_lea.vmem %s0, 4294966465
    %s915 = smov 48
    %v916 = vld [vmem:[%s914] ss:$264 sm:%s915]
    %vm917 = vcmask 1045508
    %v918 = vsel %vm917, %v916, %v913
    %s919 = scalar_lea.vmem %s0, 4294965873
    %s920 = smov 192
    %v921 = vld [vmem:[%s919] ss:$264 sm:%s920]
    %vm922 = vcmask 1047558
    %v923 = vsel %vm922, %v921, %v918
    %924 = vrot.lane.b32.xlu0 %v923, 70
    %v925 = vpop.permute.xlu0 %924
    %vm926 = vcmask 622128
    %s927 = scalar_lea.vmem [#allocation0], 32
    %928 = vst.msk [vmem:[%s927] sm:$0x3] %vm926, %v925
    %s929 = scalar_lea.vmem [#allocation0], 6
    %930 = vst.msk [vmem:[%s929] sm:$0xc] %vm926, %v925
    %s931 = scalar_lea.vmem [#allocation0], 76
    %932 = vst.msk [vmem:[%s931] sm:$0x30] %vm926, %v925
    %s933 = scalar_lea.vmem [#allocation0], 50
    %934 = vst.msk [vmem:[%s933] sm:$0xc0] %vm926, %v925
    %s935 = scalar_lea.vmem %s0, 182
    %s936 = smov 3
    %v937 = vld [vmem:[%s935] ss:$264 sm:%s936]
    %s938 = scalar_lea.vmem %s0, 4294966886
    %s939 = smov 12
    %v940 = vld [vmem:[%s938] ss:$264 sm:%s939]
    %vm941 = vcmask 1043458
    %v942 = vsel %vm941, %v940, %v937
    %s943 = scalar_lea.vmem %s0, 4294966294
    %s944 = smov 48
    %v945 = vld [vmem:[%s943] ss:$264 sm:%s944]
    %vm946 = vcmask 1045508
    %v947 = vsel %vm946, %v945, %v942
    %s948 = scalar_lea.vmem %s0, 4294965958
    %s949 = smov 192
    %v950 = vld [vmem:[%s948] ss:$264 sm:%s949]
    %vm951 = vcmask 1047558
    %v952 = vsel %vm951, %v950, %v947
    %953 = vrot.lane.b32.xlu0 %v952, 68
    %v954 = vpop.permute.xlu0 %953
    %vm955 = vcmask 605728
    %s956 = scalar_lea.vmem [#allocation0], 64
    %957 = vst.msk [vmem:[%s956] sm:$0x3] %vm955, %v954
    %s958 = scalar_lea.vmem [#allocation0], 38
    %959 = vst.msk [vmem:[%s958] sm:$0xc] %vm955, %v954
    %s960 = scalar_lea.vmem [#allocation0], 12
    %961 = vst.msk [vmem:[%s960] sm:$0x30] %vm955, %v954
    %s962 = scalar_lea.vmem [#allocation0], 82
    %963 = vst.msk [vmem:[%s962] sm:$0xc0] %vm955, %v954
    %s964 = scalar_lea.vmem %s0, 11
    %s965 = smov 3
    %v966 = vld [vmem:[%s964] ss:$264 sm:%s965]
    %s967 = scalar_lea.vmem %s0, 4294966971
    %s968 = smov 12
    %v969 = vld [vmem:[%s967] ss:$264 sm:%s968]
    %vm970 = vcmask 1043458
    %v971 = vsel %vm970, %v969, %v966
    %s972 = scalar_lea.vmem %s0, 4294966379
    %s973 = smov 48
    %v974 = vld [vmem:[%s972] ss:$264 sm:%s973]
    %vm975 = vcmask 1045508
    %v976 = vsel %vm975, %v974, %v971
    %s977 = scalar_lea.vmem %s0, 4294965787
    %s978 = smov 192
    %v979 = vld [vmem:[%s977] ss:$264 sm:%s978]
    %vm980 = vcmask 1047558
    %v981 = vsel %vm980, %v979, %v976
    %982 = vrot.lane.b32.xlu0 %v981, 66
    %v983 = vpop.permute.xlu0 %982
    %vm984 = vcmask 589328
    %985 = vst.msk [vmem:[#allocation0] sm:$0x3] %vm984, %v983
    %s986 = scalar_lea.vmem [#allocation0], 70
    %987 = vst.msk [vmem:[%s986] sm:$0xc] %vm984, %v983
    %s988 = scalar_lea.vmem [#allocation0], 44
    %989 = vst.msk [vmem:[%s988] sm:$0x30] %vm984, %v983
    %s990 = scalar_lea.vmem [#allocation0], 18
    %991 = vst.msk [vmem:[%s990] sm:$0xc0] %vm984, %v983
    %s992 = scalar_lea.vmem %s0, 96
    %s993 = smov 3
    %v994 = vld [vmem:[%s992] ss:$264 sm:%s993]
    %s995 = scalar_lea.vmem %s0, 4294966800
    %s996 = smov 12
    %v997 = vld [vmem:[%s995] ss:$264 sm:%s996]
    %vm998 = vcmask 1043458
    %v999 = vsel %vm998, %v997, %v994
    %s1000 = scalar_lea.vmem %s0, 4294966464
    %s1001 = smov 48
    %v1002 = vld [vmem:[%s1000] ss:$264 sm:%s1001]
    %vm1003 = vcmask 1045508
    %v1004 = vsel %vm1003, %v1002, %v999
    %s1005 = scalar_lea.vmem %s0, 4294965872
    %s1006 = smov 192
    %v1007 = vld [vmem:[%s1005] ss:$264 sm:%s1006]
    %vm1008 = vcmask 1047558
    %v1009 = vsel %vm1008, %v1007, %v1004
    %1010 = vrot.lane.b32.xlu0 %v1009, 64
    %v1011 = vpop.permute.xlu0 %1010
    %vm1012 = vcmask 572928
    %s1013 = scalar_lea.vmem [#allocation0], 32
    %1014 = vst.msk [vmem:[%s1013] sm:$0x3] %vm1012, %v1011
    %s1015 = scalar_lea.vmem [#allocation0], 6
    %1016 = vst.msk [vmem:[%s1015] sm:$0xc] %vm1012, %v1011
    %s1017 = scalar_lea.vmem [#allocation0], 76
    %1018 = vst.msk [vmem:[%s1017] sm:$0x30] %vm1012, %v1011
    %s1019 = scalar_lea.vmem [#allocation0], 50
    %1020 = vst.msk [vmem:[%s1019] sm:$0xc0] %vm1012, %v1011
    %s1021 = scalar_lea.vmem %s0, 181
    %s1022 = smov 3
    %v1023 = vld [vmem:[%s1021] ss:$264 sm:%s1022]
    %s1024 = scalar_lea.vmem %s0, 4294966885
    %s1025 = smov 12
    %v1026 = vld [vmem:[%s1024] ss:$264 sm:%s1025]
    %vm1027 = vcmask 1043458
    %v1028 = vsel %vm1027, %v1026, %v1023
    %s1029 = scalar_lea.vmem %s0, 4294966293
    %s1030 = smov 48
    %v1031 = vld [vmem:[%s1029] ss:$264 sm:%s1030]
    %vm1032 = vcmask 1045508
    %v1033 = vsel %vm1032, %v1031, %v1028
    %s1034 = scalar_lea.vmem %s0, 4294965957
    %s1035 = smov 192
    %v1036 = vld [vmem:[%s1034] ss:$264 sm:%s1035]
    %vm1037 = vcmask 1047558
    %v1038 = vsel %vm1037, %v1036, %v1033
    %1039 = vrot.lane.b32.xlu0 %v1038, 62
    %v1040 = vpop.permute.xlu0 %1039
    %vm1041 = vcmask 556528
    %s1042 = scalar_lea.vmem [#allocation0], 64
    %1043 = vst.msk [vmem:[%s1042] sm:$0x3] %vm1041, %v1040
    %s1044 = scalar_lea.vmem [#allocation0], 38
    %1045 = vst.msk [vmem:[%s1044] sm:$0xc] %vm1041, %v1040
    %s1046 = scalar_lea.vmem [#allocation0], 12
    %1047 = vst.msk [vmem:[%s1046] sm:$0x30] %vm1041, %v1040
    %s1048 = scalar_lea.vmem [#allocation0], 82
    %1049 = vst.msk [vmem:[%s1048] sm:$0xc0] %vm1041, %v1040
    %s1050 = scalar_lea.vmem %s0, 10
    %s1051 = smov 3
    %v1052 = vld [vmem:[%s1050] ss:$264 sm:%s1051]
    %s1053 = scalar_lea.vmem %s0, 4294966970
    %s1054 = smov 12
    %v1055 = vld [vmem:[%s1053] ss:$264 sm:%s1054]
    %vm1056 = vcmask 1043458
    %v1057 = vsel %vm1056, %v1055, %v1052
    %s1058 = scalar_lea.vmem %s0, 4294966378
    %s1059 = smov 48
    %v1060 = vld [vmem:[%s1058] ss:$264 sm:%s1059]
    %vm1061 = vcmask 1045508
    %v1062 = vsel %vm1061, %v1060, %v1057
    %s1063 = scalar_lea.vmem %s0, 4294965786
    %s1064 = smov 192
    %v1065 = vld [vmem:[%s1063] ss:$264 sm:%s1064]
    %vm1066 = vcmask 1047558
    %v1067 = vsel %vm1066, %v1065, %v1062
    %1068 = vrot.lane.b32.xlu0 %v1067, 60
    %v1069 = vpop.permute.xlu0 %1068
    %vm1070 = vcmask 540128
    %1071 = vst.msk [vmem:[#allocation0] sm:$0x3] %vm1070, %v1069
    %s1072 = scalar_lea.vmem [#allocation0], 70
    %1073 = vst.msk [vmem:[%s1072] sm:$0xc] %vm1070, %v1069
    %s1074 = scalar_lea.vmem [#allocation0], 44
    %1075 = vst.msk [vmem:[%s1074] sm:$0x30] %vm1070, %v1069
    %s1076 = scalar_lea.vmem [#allocation0], 18
    %1077 = vst.msk [vmem:[%s1076] sm:$0xc0] %vm1070, %v1069
    %s1078 = scalar_lea.vmem %s0, 95
    %s1079 = smov 3
    %v1080 = vld [vmem:[%s1078] ss:$264 sm:%s1079]
    %s1081 = scalar_lea.vmem %s0, 4294966799
    %s1082 = smov 12
    %v1083 = vld [vmem:[%s1081] ss:$264 sm:%s1082]
    %vm1084 = vcmask 1043458
    %v1085 = vsel %vm1084, %v1083, %v1080
    %s1086 = scalar_lea.vmem %s0, 4294966463
    %s1087 = smov 48
    %v1088 = vld [vmem:[%s1086] ss:$264 sm:%s1087]
    %vm1089 = vcmask 1045508
    %v1090 = vsel %vm1089, %v1088, %v1085
    %s1091 = scalar_lea.vmem %s0, 4294965871
    %s1092 = smov 192
    %v1093 = vld [vmem:[%s1091] ss:$264 sm:%s1092]
    %vm1094 = vcmask 1047558
    %v1095 = vsel %vm1094, %v1093, %v1090
    %1096 = vrot.lane.b32.xlu0 %v1095, 58
    %v1097 = vpop.permute.xlu0 %1096
    %vm1098 = vcmask 523728
    %s1099 = scalar_lea.vmem [#allocation0], 32
    %1100 = vst.msk [vmem:[%s1099] sm:$0x3] %vm1098, %v1097
    %s1101 = scalar_lea.vmem [#allocation0], 6
    %1102 = vst.msk [vmem:[%s1101] sm:$0xc] %vm1098, %v1097
    %s1103 = scalar_lea.vmem [#allocation0], 76
    %1104 = vst.msk [vmem:[%s1103] sm:$0x30] %vm1098, %v1097
    %s1105 = scalar_lea.vmem [#allocation0], 50
    %1106 = vst.msk [vmem:[%s1105] sm:$0xc0] %vm1098, %v1097
    %s1107 = scalar_lea.vmem %s0, 180
    %s1108 = smov 3
    %v1109 = vld [vmem:[%s1107] ss:$264 sm:%s1108]
    %s1110 = scalar_lea.vmem %s0, 4294966884
    %s1111 = smov 12
    %v1112 = vld [vmem:[%s1110] ss:$264 sm:%s1111]
    %vm1113 = vcmask 1043458
    %v1114 = vsel %vm1113, %v1112, %v1109
    %s1115 = scalar_lea.vmem %s0, 4294966292
    %s1116 = smov 48
    %v1117 = vld [vmem:[%s1115] ss:$264 sm:%s1116]
    %vm1118 = vcmask 1045508
    %v1119 = vsel %vm1118, %v1117, %v1114
    %s1120 = scalar_lea.vmem %s0, 4294965956
    %s1121 = smov 192
    %v1122 = vld [vmem:[%s1120] ss:$264 sm:%s1121]
    %vm1123 = vcmask 1047558
    %v1124 = vsel %vm1123, %v1122, %v1119
    %1125 = vrot.lane.b32.xlu0 %v1124, 56
    %v1126 = vpop.permute.xlu0 %1125
    %vm1127 = vcmask 507328
    %s1128 = scalar_lea.vmem [#allocation0], 64
    %1129 = vst.msk [vmem:[%s1128] sm:$0x3] %vm1127, %v1126
    %s1130 = scalar_lea.vmem [#allocation0], 38
    %1131 = vst.msk [vmem:[%s1130] sm:$0xc] %vm1127, %v1126
    %s1132 = scalar_lea.vmem [#allocation0], 12
    %1133 = vst.msk [vmem:[%s1132] sm:$0x30] %vm1127, %v1126
    %s1134 = scalar_lea.vmem [#allocation0], 82
    %1135 = vst.msk [vmem:[%s1134] sm:$0xc0] %vm1127, %v1126
    %s1136 = scalar_lea.vmem %s0, 9
    %s1137 = smov 3
    %v1138 = vld [vmem:[%s1136] ss:$264 sm:%s1137]
    %s1139 = scalar_lea.vmem %s0, 4294966969
    %s1140 = smov 12
    %v1141 = vld [vmem:[%s1139] ss:$264 sm:%s1140]
    %vm1142 = vcmask 1043458
    %v1143 = vsel %vm1142, %v1141, %v1138
    %s1144 = scalar_lea.vmem %s0, 4294966377
    %s1145 = smov 48
    %v1146 = vld [vmem:[%s1144] ss:$264 sm:%s1145]
    %vm1147 = vcmask 1045508
    %v1148 = vsel %vm1147, %v1146, %v1143
    %s1149 = scalar_lea.vmem %s0, 4294965785
    %s1150 = smov 192
    %v1151 = vld [vmem:[%s1149] ss:$264 sm:%s1150]
    %vm1152 = vcmask 1047558
    %v1153 = vsel %vm1152, %v1151, %v1148
    %1154 = vrot.lane.b32.xlu0 %v1153, 54
    %v1155 = vpop.permute.xlu0 %1154
    %vm1156 = vcmask 490928
    %1157 = vst.msk [vmem:[#allocation0] sm:$0x3] %vm1156, %v1155
    %s1158 = scalar_lea.vmem [#allocation0], 70
    %1159 = vst.msk [vmem:[%s1158] sm:$0xc] %vm1156, %v1155
    %s1160 = scalar_lea.vmem [#allocation0], 44
    %1161 = vst.msk [vmem:[%s1160] sm:$0x30] %vm1156, %v1155
    %s1162 = scalar_lea.vmem [#allocation0], 18
    %1163 = vst.msk [vmem:[%s1162] sm:$0xc0] %vm1156, %v1155
    %s1164 = scalar_lea.vmem %s0, 94
    %s1165 = smov 3
    %v1166 = vld [vmem:[%s1164] ss:$264 sm:%s1165]
    %s1167 = scalar_lea.vmem %s0, 4294966798
    %s1168 = smov 12
    %v1169 = vld [vmem:[%s1167] ss:$264 sm:%s1168]
    %vm1170 = vcmask 1043458
    %v1171 = vsel %vm1170, %v1169, %v1166
    %s1172 = scalar_lea.vmem %s0, 4294966462
    %s1173 = smov 48
    %v1174 = vld [vmem:[%s1172] ss:$264 sm:%s1173]
    %vm1175 = vcmask 1045508
    %v1176 = vsel %vm1175, %v1174, %v1171
    %s1177 = scalar_lea.vmem %s0, 4294965870
    %s1178 = smov 192
    %v1179 = vld [vmem:[%s1177] ss:$264 sm:%s1178]
    %vm1180 = vcmask 1047558
    %v1181 = vsel %vm1180, %v1179, %v1176
    %1182 = vrot.lane.b32.xlu0 %v1181, 52
    %v1183 = vpop.permute.xlu0 %1182
    %vm1184 = vcmask 474528
    %s1185 = scalar_lea.vmem [#allocation0], 32
    %1186 = vst.msk [vmem:[%s1185] sm:$0x3] %vm1184, %v1183
    %s1187 = scalar_lea.vmem [#allocation0], 6
    %1188 = vst.msk [vmem:[%s1187] sm:$0xc] %vm1184, %v1183
    %s1189 = scalar_lea.vmem [#allocation0], 76
    %1190 = vst.msk [vmem:[%s1189] sm:$0x30] %vm1184, %v1183
    %s1191 = scalar_lea.vmem [#allocation0], 50
    %1192 = vst.msk [vmem:[%s1191] sm:$0xc0] %vm1184, %v1183
    %s1193 = scalar_lea.vmem %s0, 179
    %s1194 = smov 3
    %v1195 = vld [vmem:[%s1193] ss:$264 sm:%s1194]
    %s1196 = scalar_lea.vmem %s0, 4294966883
    %s1197 = smov 12
    %v1198 = vld [vmem:[%s1196] ss:$264 sm:%s1197]
    %vm1199 = vcmask 1043458
    %v1200 = vsel %vm1199, %v1198, %v1195
    %s1201 = scalar_lea.vmem %s0, 4294966291
    %s1202 = smov 48
    %v1203 = vld [vmem:[%s1201] ss:$264 sm:%s1202]
    %vm1204 = vcmask 1045508
    %v1205 = vsel %vm1204, %v1203, %v1200
    %s1206 = scalar_lea.vmem %s0, 4294965955
    %s1207 = smov 192
    %v1208 = vld [vmem:[%s1206] ss:$264 sm:%s1207]
    %vm1209 = vcmask 1047558
    %v1210 = vsel %vm1209, %v1208, %v1205
    %1211 = vrot.lane.b32.xlu0 %v1210, 50
    %v1212 = vpop.permute.xlu0 %1211
    %vm1213 = vcmask 458128
    %s1214 = scalar_lea.vmem [#allocation0], 64
    %1215 = vst.msk [vmem:[%s1214] sm:$0x3] %vm1213, %v1212
    %s1216 = scalar_lea.vmem [#allocation0], 38
    %1217 = vst.msk [vmem:[%s1216] sm:$0xc] %vm1213, %v1212
    %s1218 = scalar_lea.vmem [#allocation0], 12
    %1219 = vst.msk [vmem:[%s1218] sm:$0x30] %vm1213, %v1212
    %s1220 = scalar_lea.vmem [#allocation0], 82
    %1221 = vst.msk [vmem:[%s1220] sm:$0xc0] %vm1213, %v1212
    %s1222 = scalar_lea.vmem %s0, 8
    %s1223 = smov 3
    %v1224 = vld [vmem:[%s1222] ss:$264 sm:%s1223]
    %s1225 = scalar_lea.vmem %s0, 4294966968
    %s1226 = smov 12
    %v1227 = vld [vmem:[%s1225] ss:$264 sm:%s1226]
    %vm1228 = vcmask 1043458
    %v1229 = vsel %vm1228, %v1227, %v1224
    %s1230 = scalar_lea.vmem %s0, 4294966376
    %s1231 = smov 48
    %v1232 = vld [vmem:[%s1230] ss:$264 sm:%s1231]
    %vm1233 = vcmask 1045508
    %v1234 = vsel %vm1233, %v1232, %v1229
    %s1235 = scalar_lea.vmem %s0, 4294965784
    %s1236 = smov 192
    %v1237 = vld [vmem:[%s1235] ss:$264 sm:%s1236]
    %vm1238 = vcmask 1047558
    %v1239 = vsel %vm1238, %v1237, %v1234
    %1240 = vrot.lane.b32.xlu0 %v1239, 48
    %v1241 = vpop.permute.xlu0 %1240
    %vm1242 = vcmask 441728
    %1243 = vst.msk [vmem:[#allocation0] sm:$0x3] %vm1242, %v1241
    %s1244 = scalar_lea.vmem [#allocation0], 70
    %1245 = vst.msk [vmem:[%s1244] sm:$0xc] %vm1242, %v1241
    %s1246 = scalar_lea.vmem [#allocation0], 44
    %1247 = vst.msk [vmem:[%s1246] sm:$0x30] %vm1242, %v1241
    %s1248 = scalar_lea.vmem [#allocation0], 18
    %1249 = vst.msk [vmem:[%s1248] sm:$0xc0] %vm1242, %v1241
    %s1250 = scalar_lea.vmem %s0, 93
    %s1251 = smov 3
    %v1252 = vld [vmem:[%s1250] ss:$264 sm:%s1251]
    %s1253 = scalar_lea.vmem %s0, 4294966797
    %s1254 = smov 12
    %v1255 = vld [vmem:[%s1253] ss:$264 sm:%s1254]
    %vm1256 = vcmask 1043458
    %v1257 = vsel %vm1256, %v1255, %v1252
    %s1258 = scalar_lea.vmem %s0, 4294966461
    %s1259 = smov 48
    %v1260 = vld [vmem:[%s1258] ss:$264 sm:%s1259]
    %vm1261 = vcmask 1045508
    %v1262 = vsel %vm1261, %v1260, %v1257
    %s1263 = scalar_lea.vmem %s0, 4294965869
    %s1264 = smov 192
    %v1265 = vld [vmem:[%s1263] ss:$264 sm:%s1264]
    %vm1266 = vcmask 1047558
    %v1267 = vsel %vm1266, %v1265, %v1262
    %1268 = vrot.lane.b32.xlu0 %v1267, 46
    %v1269 = vpop.permute.xlu0 %1268
    %vm1270 = vcmask 425328
    %s1271 = scalar_lea.vmem [#allocation0], 32
    %1272 = vst.msk [vmem:[%s1271] sm:$0x3] %vm1270, %v1269
    %s1273 = scalar_lea.vmem [#allocation0], 6
    %1274 = vst.msk [vmem:[%s1273] sm:$0xc] %vm1270, %v1269
    %s1275 = scalar_lea.vmem [#allocation0], 76
    %1276 = vst.msk [vmem:[%s1275] sm:$0x30] %vm1270, %v1269
    %s1277 = scalar_lea.vmem [#allocation0], 50
    %1278 = vst.msk [vmem:[%s1277] sm:$0xc0] %vm1270, %v1269
    %s1279 = scalar_lea.vmem %s0, 178
    %s1280 = smov 3
    %v1281 = vld [vmem:[%s1279] ss:$264 sm:%s1280]
    %s1282 = scalar_lea.vmem %s0, 4294966882
    %s1283 = smov 12
    %v1284 = vld [vmem:[%s1282] ss:$264 sm:%s1283]
    %vm1285 = vcmask 1043458
    %v1286 = vsel %vm1285, %v1284, %v1281
    %s1287 = scalar_lea.vmem %s0, 4294966290
    %s1288 = smov 48
    %v1289 = vld [vmem:[%s1287] ss:$264 sm:%s1288]
    %vm1290 = vcmask 1045508
    %v1291 = vsel %vm1290, %v1289, %v1286
    %s1292 = scalar_lea.vmem %s0, 4294965954
    %s1293 = smov 192
    %v1294 = vld [vmem:[%s1292] ss:$264 sm:%s1293]
    %vm1295 = vcmask 1047558
    %v1296 = vsel %vm1295, %v1294, %v1291
    %1297 = vrot.lane.b32.xlu0 %v1296, 44
    %v1298 = vpop.permute.xlu0 %1297
    %vm1299 = vcmask 408928
    %s1300 = scalar_lea.vmem [#allocation0], 64
    %1301 = vst.msk [vmem:[%s1300] sm:$0x3] %vm1299, %v1298
    %s1302 = scalar_lea.vmem [#allocation0], 38
    %1303 = vst.msk [vmem:[%s1302] sm:$0xc] %vm1299, %v1298
    %s1304 = scalar_lea.vmem [#allocation0], 12
    %1305 = vst.msk [vmem:[%s1304] sm:$0x30] %vm1299, %v1298
    %s1306 = scalar_lea.vmem [#allocation0], 82
    %1307 = vst.msk [vmem:[%s1306] sm:$0xc0] %vm1299, %v1298
    %s1308 = scalar_lea.vmem %s0, 7
    %s1309 = smov 3
    %v1310 = vld [vmem:[%s1308] ss:$264 sm:%s1309]
    %s1311 = scalar_lea.vmem %s0, 4294966967
    %s1312 = smov 12
    %v1313 = vld [vmem:[%s1311] ss:$264 sm:%s1312]
    %vm1314 = vcmask 1043458
    %v1315 = vsel %vm1314, %v1313, %v1310
    %s1316 = scalar_lea.vmem %s0, 4294966375
    %s1317 = smov 48
    %v1318 = vld [vmem:[%s1316] ss:$264 sm:%s1317]
    %vm1319 = vcmask 1045508
    %v1320 = vsel %vm1319, %v1318, %v1315
    %s1321 = scalar_lea.vmem %s0, 4294965783
    %s1322 = smov 192
    %v1323 = vld [vmem:[%s1321] ss:$264 sm:%s1322]
    %vm1324 = vcmask 1047558
    %v1325 = vsel %vm1324, %v1323, %v1320
    %1326 = vrot.lane.b32.xlu0 %v1325, 42
    %v1327 = vpop.permute.xlu0 %1326
    %vm1328 = vcmask 392528
    %1329 = vst.msk [vmem:[#allocation0] sm:$0x3] %vm1328, %v1327
    %s1330 = scalar_lea.vmem [#allocation0], 70
    %1331 = vst.msk [vmem:[%s1330] sm:$0xc] %vm1328, %v1327
    %s1332 = scalar_lea.vmem [#allocation0], 44
    %1333 = vst.msk [vmem:[%s1332] sm:$0x30] %vm1328, %v1327
    %s1334 = scalar_lea.vmem [#allocation0], 18
    %1335 = vst.msk [vmem:[%s1334] sm:$0xc0] %vm1328, %v1327
    %s1336 = scalar_lea.vmem %s0, 92
    %s1337 = smov 3
    %v1338 = vld [vmem:[%s1336] ss:$264 sm:%s1337]
    %s1339 = scalar_lea.vmem %s0, 4294966796
    %s1340 = smov 12
    %v1341 = vld [vmem:[%s1339] ss:$264 sm:%s1340]
    %vm1342 = vcmask 1043458
    %v1343 = vsel %vm1342, %v1341, %v1338
    %s1344 = scalar_lea.vmem %s0, 4294966460
    %s1345 = smov 48
    %v1346 = vld [vmem:[%s1344] ss:$264 sm:%s1345]
    %vm1347 = vcmask 1045508
    %v1348 = vsel %vm1347, %v1346, %v1343
    %s1349 = scalar_lea.vmem %s0, 4294965868
    %s1350 = smov 192
    %v1351 = vld [vmem:[%s1349] ss:$264 sm:%s1350]
    %vm1352 = vcmask 1047558
    %v1353 = vsel %vm1352, %v1351, %v1348
    %1354 = vrot.lane.b32.xlu0 %v1353, 40
    %v1355 = vpop.permute.xlu0 %1354
    %vm1356 = vcmask 376128
    %s1357 = scalar_lea.vmem [#allocation0], 32
    %1358 = vst.msk [vmem:[%s1357] sm:$0x3] %vm1356, %v1355
    %s1359 = scalar_lea.vmem [#allocation0], 6
    %1360 = vst.msk [vmem:[%s1359] sm:$0xc] %vm1356, %v1355
    %s1361 = scalar_lea.vmem [#allocation0], 76
    %1362 = vst.msk [vmem:[%s1361] sm:$0x30] %vm1356, %v1355
    %s1363 = scalar_lea.vmem [#allocation0], 50
    %1364 = vst.msk [vmem:[%s1363] sm:$0xc0] %vm1356, %v1355
    %s1365 = scalar_lea.vmem %s0, 177
    %s1366 = smov 3
    %v1367 = vld [vmem:[%s1365] ss:$264 sm:%s1366]
    %s1368 = scalar_lea.vmem %s0, 4294966881
    %s1369 = smov 12
    %v1370 = vld [vmem:[%s1368] ss:$264 sm:%s1369]
    %vm1371 = vcmask 1043458
    %v1372 = vsel %vm1371, %v1370, %v1367
    %s1373 = scalar_lea.vmem %s0, 4294966289
    %s1374 = smov 48
    %v1375 = vld [vmem:[%s1373] ss:$264 sm:%s1374]
    %vm1376 = vcmask 1045508
    %v1377 = vsel %vm1376, %v1375, %v1372
    %s1378 = scalar_lea.vmem %s0, 4294965953
    %s1379 = smov 192
    %v1380 = vld [vmem:[%s1378] ss:$264 sm:%s1379]
    %vm1381 = vcmask 1047558
    %v1382 = vsel %vm1381, %v1380, %v1377
    %1383 = vrot.lane.b32.xlu0 %v1382, 38
    %v1384 = vpop.permute.xlu0 %1383
    %vm1385 = vcmask 359728
    %s1386 = scalar_lea.vmem [#allocation0], 64
    %1387 = vst.msk [vmem:[%s1386] sm:$0x3] %vm1385, %v1384
    %s1388 = scalar_lea.vmem [#allocation0], 38
    %1389 = vst.msk [vmem:[%s1388] sm:$0xc] %vm1385, %v1384
    %s1390 = scalar_lea.vmem [#allocation0], 12
    %1391 = vst.msk [vmem:[%s1390] sm:$0x30] %vm1385, %v1384
    %s1392 = scalar_lea.vmem [#allocation0], 82
    %1393 = vst.msk [vmem:[%s1392] sm:$0xc0] %vm1385, %v1384
    %s1394 = scalar_lea.vmem %s0, 6
    %s1395 = smov 3
    %v1396 = vld [vmem:[%s1394] ss:$264 sm:%s1395]
    %s1397 = scalar_lea.vmem %s0, 4294966966
    %s1398 = smov 12
    %v1399 = vld [vmem:[%s1397] ss:$264 sm:%s1398]
    %vm1400 = vcmask 1043458
    %v1401 = vsel %vm1400, %v1399, %v1396
    %s1402 = scalar_lea.vmem %s0, 4294966374
    %s1403 = smov 48
    %v1404 = vld [vmem:[%s1402] ss:$264 sm:%s1403]
    %vm1405 = vcmask 1045508
    %v1406 = vsel %vm1405, %v1404, %v1401
    %s1407 = scalar_lea.vmem %s0, 4294965782
    %s1408 = smov 192
    %v1409 = vld [vmem:[%s1407] ss:$264 sm:%s1408]
    %vm1410 = vcmask 1047558
    %v1411 = vsel %vm1410, %v1409, %v1406
    %1412 = vrot.lane.b32.xlu0 %v1411, 36
    %v1413 = vpop.permute.xlu0 %1412
    %vm1414 = vcmask 343328
    %1415 = vst.msk [vmem:[#allocation0] sm:$0x3] %vm1414, %v1413
    %s1416 = scalar_lea.vmem [#allocation0], 70
    %1417 = vst.msk [vmem:[%s1416] sm:$0xc] %vm1414, %v1413
    %s1418 = scalar_lea.vmem [#allocation0], 44
    %1419 = vst.msk [vmem:[%s1418] sm:$0x30] %vm1414, %v1413
    %s1420 = scalar_lea.vmem [#allocation0], 18
    %1421 = vst.msk [vmem:[%s1420] sm:$0xc0] %vm1414, %v1413
    %s1422 = scalar_lea.vmem %s0, 91
    %s1423 = smov 3
    %v1424 = vld [vmem:[%s1422] ss:$264 sm:%s1423]
    %s1425 = scalar_lea.vmem %s0, 4294966795
    %s1426 = smov 12
    %v1427 = vld [vmem:[%s1425] ss:$264 sm:%s1426]
    %vm1428 = vcmask 1043458
    %v1429 = vsel %vm1428, %v1427, %v1424
    %s1430 = scalar_lea.vmem %s0, 4294966459
    %s1431 = smov 48
    %v1432 = vld [vmem:[%s1430] ss:$264 sm:%s1431]
    %vm1433 = vcmask 1045508
    %v1434 = vsel %vm1433, %v1432, %v1429
    %s1435 = scalar_lea.vmem %s0, 4294965867
    %s1436 = smov 192
    %v1437 = vld [vmem:[%s1435] ss:$264 sm:%s1436]
    %vm1438 = vcmask 1047558
    %v1439 = vsel %vm1438, %v1437, %v1434
    %1440 = vrot.lane.b32.xlu0 %v1439, 34
    %v1441 = vpop.permute.xlu0 %1440
    %vm1442 = vcmask 326928
    %s1443 = scalar_lea.vmem [#allocation0], 32
    %1444 = vst.msk [vmem:[%s1443] sm:$0x3] %vm1442, %v1441
    %s1445 = scalar_lea.vmem [#allocation0], 6
    %1446 = vst.msk [vmem:[%s1445] sm:$0xc] %vm1442, %v1441
    %s1447 = scalar_lea.vmem [#allocation0], 76
    %1448 = vst.msk [vmem:[%s1447] sm:$0x30] %vm1442, %v1441
    %s1449 = scalar_lea.vmem [#allocation0], 50
    %1450 = vst.msk [vmem:[%s1449] sm:$0xc0] %vm1442, %v1441
    %s1451 = scalar_lea.vmem %s0, 176
    %s1452 = smov 3
    %v1453 = vld [vmem:[%s1451] ss:$264 sm:%s1452]
    %s1454 = scalar_lea.vmem %s0, 4294966880
    %s1455 = smov 12
    %v1456 = vld [vmem:[%s1454] ss:$264 sm:%s1455]
    %vm1457 = vcmask 1043458
    %v1458 = vsel %vm1457, %v1456, %v1453
    %s1459 = scalar_lea.vmem %s0, 4294966288
    %s1460 = smov 48
    %v1461 = vld [vmem:[%s1459] ss:$264 sm:%s1460]
    %vm1462 = vcmask 1045508
    %v1463 = vsel %vm1462, %v1461, %v1458
    %s1464 = scalar_lea.vmem %s0, 4294965952
    %s1465 = smov 192
    %v1466 = vld [vmem:[%s1464] ss:$264 sm:%s1465]
    %vm1467 = vcmask 1047558
    %v1468 = vsel %vm1467, %v1466, %v1463
    %1469 = vrot.lane.b32.xlu0 %v1468, 32
    %v1470 = vpop.permute.xlu0 %1469
    %vm1471 = vcmask 310528
    %s1472 = scalar_lea.vmem [#allocation0], 64
    %1473 = vst.msk [vmem:[%s1472] sm:$0x3] %vm1471, %v1470
    %s1474 = scalar_lea.vmem [#allocation0], 38
    %1475 = vst.msk [vmem:[%s1474] sm:$0xc] %vm1471, %v1470
    %s1476 = scalar_lea.vmem [#allocation0], 12
    %1477 = vst.msk [vmem:[%s1476] sm:$0x30] %vm1471, %v1470
    %s1478 = scalar_lea.vmem [#allocation0], 82
    %1479 = vst.msk [vmem:[%s1478] sm:$0xc0] %vm1471, %v1470
    %s1480 = scalar_lea.vmem %s0, 5
    %s1481 = smov 3
    %v1482 = vld [vmem:[%s1480] ss:$264 sm:%s1481]
    %s1483 = scalar_lea.vmem %s0, 4294966965
    %s1484 = smov 12
    %v1485 = vld [vmem:[%s1483] ss:$264 sm:%s1484]
    %vm1486 = vcmask 1043458
    %v1487 = vsel %vm1486, %v1485, %v1482
    %s1488 = scalar_lea.vmem %s0, 4294966373
    %s1489 = smov 48
    %v1490 = vld [vmem:[%s1488] ss:$264 sm:%s1489]
    %vm1491 = vcmask 1045508
    %v1492 = vsel %vm1491, %v1490, %v1487
    %s1493 = scalar_lea.vmem %s0, 4294965781
    %s1494 = smov 192
    %v1495 = vld [vmem:[%s1493] ss:$264 sm:%s1494]
    %vm1496 = vcmask 1047558
    %v1497 = vsel %vm1496, %v1495, %v1492
    %1498 = vrot.lane.b32.xlu0 %v1497, 30
    %v1499 = vpop.permute.xlu0 %1498
    %vm1500 = vcmask 294128
    %1501 = vst.msk [vmem:[#allocation0] sm:$0x3] %vm1500, %v1499
    %s1502 = scalar_lea.vmem [#allocation0], 70
    %1503 = vst.msk [vmem:[%s1502] sm:$0xc] %vm1500, %v1499
    %s1504 = scalar_lea.vmem [#allocation0], 44
    %1505 = vst.msk [vmem:[%s1504] sm:$0x30] %vm1500, %v1499
    %s1506 = scalar_lea.vmem [#allocation0], 18
    %1507 = vst.msk [vmem:[%s1506] sm:$0xc0] %vm1500, %v1499
    %s1508 = scalar_lea.vmem %s0, 90
    %s1509 = smov 3
    %v1510 = vld [vmem:[%s1508] ss:$264 sm:%s1509]
    %s1511 = scalar_lea.vmem %s0, 4294966794
    %s1512 = smov 12
    %v1513 = vld [vmem:[%s1511] ss:$264 sm:%s1512]
    %vm1514 = vcmask 1043458
    %v1515 = vsel %vm1514, %v1513, %v1510
    %s1516 = scalar_lea.vmem %s0, 4294966458
    %s1517 = smov 48
    %v1518 = vld [vmem:[%s1516] ss:$264 sm:%s1517]
    %vm1519 = vcmask 1045508
    %v1520 = vsel %vm1519, %v1518, %v1515
    %s1521 = scalar_lea.vmem %s0, 4294965866
    %s1522 = smov 192
    %v1523 = vld [vmem:[%s1521] ss:$264 sm:%s1522]
    %vm1524 = vcmask 1047558
    %v1525 = vsel %vm1524, %v1523, %v1520
    %1526 = vrot.lane.b32.xlu0 %v1525, 28
    %v1527 = vpop.permute.xlu0 %1526
    %vm1528 = vcmask 277728
    %s1529 = scalar_lea.vmem [#allocation0], 32
    %1530 = vst.msk [vmem:[%s1529] sm:$0x3] %vm1528, %v1527
    %s1531 = scalar_lea.vmem [#allocation0], 6
    %1532 = vst.msk [vmem:[%s1531] sm:$0xc] %vm1528, %v1527
    %s1533 = scalar_lea.vmem [#allocation0], 76
    %1534 = vst.msk [vmem:[%s1533] sm:$0x30] %vm1528, %v1527
    %s1535 = scalar_lea.vmem [#allocation0], 50
    %1536 = vst.msk [vmem:[%s1535] sm:$0xc0] %vm1528, %v1527
    %s1537 = scalar_lea.vmem %s0, 175
    %s1538 = smov 3
    %v1539 = vld [vmem:[%s1537] ss:$264 sm:%s1538]
    %s1540 = scalar_lea.vmem %s0, 4294966879
    %s1541 = smov 12
    %v1542 = vld [vmem:[%s1540] ss:$264 sm:%s1541]
    %vm1543 = vcmask 1043458
    %v1544 = vsel %vm1543, %v1542, %v1539
    %s1545 = scalar_lea.vmem %s0, 4294966287
    %s1546 = smov 48
    %v1547 = vld [vmem:[%s1545] ss:$264 sm:%s1546]
    %vm1548 = vcmask 1045508
    %v1549 = vsel %vm1548, %v1547, %v1544
    %s1550 = scalar_lea.vmem %s0, 4294965951
    %s1551 = smov 192
    %v1552 = vld [vmem:[%s1550] ss:$264 sm:%s1551]
    %vm1553 = vcmask 1047558
    %v1554 = vsel %vm1553, %v1552, %v1549
    %1555 = vrot.lane.b32.xlu0 %v1554, 26
    %v1556 = vpop.permute.xlu0 %1555
    %vm1557 = vcmask 261328
    %s1558 = scalar_lea.vmem [#allocation0], 64
    %1559 = vst.msk [vmem:[%s1558] sm:$0x3] %vm1557, %v1556
    %s1560 = scalar_lea.vmem [#allocation0], 38
    %1561 = vst.msk [vmem:[%s1560] sm:$0xc] %vm1557, %v1556
    %s1562 = scalar_lea.vmem [#allocation0], 12
    %1563 = vst.msk [vmem:[%s1562] sm:$0x30] %vm1557, %v1556
    %s1564 = scalar_lea.vmem [#allocation0], 82
    %1565 = vst.msk [vmem:[%s1564] sm:$0xc0] %vm1557, %v1556
    %s1566 = scalar_lea.vmem %s0, 4
    %s1567 = smov 3
    %v1568 = vld [vmem:[%s1566] ss:$264 sm:%s1567]
    %s1569 = scalar_lea.vmem %s0, 4294966964
    %s1570 = smov 12
    %v1571 = vld [vmem:[%s1569] ss:$264 sm:%s1570]
    %vm1572 = vcmask 1043458
    %v1573 = vsel %vm1572, %v1571, %v1568
    %s1574 = scalar_lea.vmem %s0, 4294966372
    %s1575 = smov 48
    %v1576 = vld [vmem:[%s1574] ss:$264 sm:%s1575]
    %vm1577 = vcmask 1045508
    %v1578 = vsel %vm1577, %v1576, %v1573
    %s1579 = scalar_lea.vmem %s0, 4294965780
    %s1580 = smov 192
    %v1581 = vld [vmem:[%s1579] ss:$264 sm:%s1580]
    %vm1582 = vcmask 1047558
    %v1583 = vsel %vm1582, %v1581, %v1578
    %1584 = vrot.lane.b32.xlu0 %v1583, 24
    %v1585 = vpop.permute.xlu0 %1584
    %vm1586 = vcmask 244928
    %1587 = vst.msk [vmem:[#allocation0] sm:$0x3] %vm1586, %v1585
    %s1588 = scalar_lea.vmem [#allocation0], 70
    %1589 = vst.msk [vmem:[%s1588] sm:$0xc] %vm1586, %v1585
    %s1590 = scalar_lea.vmem [#allocation0], 44
    %1591 = vst.msk [vmem:[%s1590] sm:$0x30] %vm1586, %v1585
    %s1592 = scalar_lea.vmem [#allocation0], 18
    %1593 = vst.msk [vmem:[%s1592] sm:$0xc0] %vm1586, %v1585
    %s1594 = scalar_lea.vmem %s0, 89
    %s1595 = smov 3
    %v1596 = vld [vmem:[%s1594] ss:$264 sm:%s1595]
    %s1597 = scalar_lea.vmem %s0, 4294966793
    %s1598 = smov 12
    %v1599 = vld [vmem:[%s1597] ss:$264 sm:%s1598]
    %vm1600 = vcmask 1043458
    %v1601 = vsel %vm1600, %v1599, %v1596
    %s1602 = scalar_lea.vmem %s0, 4294966457
    %s1603 = smov 48
    %v1604 = vld [vmem:[%s1602] ss:$264 sm:%s1603]
    %vm1605 = vcmask 1045508
    %v1606 = vsel %vm1605, %v1604, %v1601
    %s1607 = scalar_lea.vmem %s0, 4294965865
    %s1608 = smov 192
    %v1609 = vld [vmem:[%s1607] ss:$264 sm:%s1608]
    %vm1610 = vcmask 1047558
    %v1611 = vsel %vm1610, %v1609, %v1606
    %1612 = vrot.lane.b32.xlu0 %v1611, 22
    %v1613 = vpop.permute.xlu0 %1612
    %vm1614 = vcmask 228528
    %s1615 = scalar_lea.vmem [#allocation0], 32
    %1616 = vst.msk [vmem:[%s1615] sm:$0x3] %vm1614, %v1613
    %s1617 = scalar_lea.vmem [#allocation0], 6
    %1618 = vst.msk [vmem:[%s1617] sm:$0xc] %vm1614, %v1613
    %s1619 = scalar_lea.vmem [#allocation0], 76
    %1620 = vst.msk [vmem:[%s1619] sm:$0x30] %vm1614, %v1613
    %s1621 = scalar_lea.vmem [#allocation0], 50
    %1622 = vst.msk [vmem:[%s1621] sm:$0xc0] %vm1614, %v1613
    %s1623 = scalar_lea.vmem %s0, 174
    %s1624 = smov 3
    %v1625 = vld [vmem:[%s1623] ss:$264 sm:%s1624]
    %s1626 = scalar_lea.vmem %s0, 4294966878
    %s1627 = smov 12
    %v1628 = vld [vmem:[%s1626] ss:$264 sm:%s1627]
    %vm1629 = vcmask 1043458
    %v1630 = vsel %vm1629, %v1628, %v1625
    %s1631 = scalar_lea.vmem %s0, 4294966286
    %s1632 = smov 48
    %v1633 = vld [vmem:[%s1631] ss:$264 sm:%s1632]
    %vm1634 = vcmask 1045508
    %v1635 = vsel %vm1634, %v1633, %v1630
    %s1636 = scalar_lea.vmem %s0, 4294965950
    %s1637 = smov 192
    %v1638 = vld [vmem:[%s1636] ss:$264 sm:%s1637]
    %vm1639 = vcmask 1047558
    %v1640 = vsel %vm1639, %v1638, %v1635
    %1641 = vrot.lane.b32.xlu0 %v1640, 20
    %v1642 = vpop.permute.xlu0 %1641
    %vm1643 = vcmask 212128
    %s1644 = scalar_lea.vmem [#allocation0], 64
    %1645 = vst.msk [vmem:[%s1644] sm:$0x3] %vm1643, %v1642
    %s1646 = scalar_lea.vmem [#allocation0], 38
    %1647 = vst.msk [vmem:[%s1646] sm:$0xc] %vm1643, %v1642
    %s1648 = scalar_lea.vmem [#allocation0], 12
    %1649 = vst.msk [vmem:[%s1648] sm:$0x30] %vm1643, %v1642
    %s1650 = scalar_lea.vmem [#allocation0], 82
    %1651 = vst.msk [vmem:[%s1650] sm:$0xc0] %vm1643, %v1642
    %s1652 = scalar_lea.vmem %s0, 3
    %s1653 = smov 3
    %v1654 = vld [vmem:[%s1652] ss:$264 sm:%s1653]
    %s1655 = scalar_lea.vmem %s0, 4294966963
    %s1656 = smov 12
    %v1657 = vld [vmem:[%s1655] ss:$264 sm:%s1656]
    %vm1658 = vcmask 1043458
    %v1659 = vsel %vm1658, %v1657, %v1654
    %s1660 = scalar_lea.vmem %s0, 4294966371
    %s1661 = smov 48
    %v1662 = vld [vmem:[%s1660] ss:$264 sm:%s1661]
    %vm1663 = vcmask 1045508
    %v1664 = vsel %vm1663, %v1662, %v1659
    %s1665 = scalar_lea.vmem %s0, 4294965779
    %s1666 = smov 192
    %v1667 = vld [vmem:[%s1665] ss:$264 sm:%s1666]
    %vm1668 = vcmask 1047558
    %v1669 = vsel %vm1668, %v1667, %v1664
    %1670 = vrot.lane.b32.xlu0 %v1669, 18
    %v1671 = vpop.permute.xlu0 %1670
    %vm1672 = vcmask 195728
    %1673 = vst.msk [vmem:[#allocation0] sm:$0x3] %vm1672, %v1671
    %s1674 = scalar_lea.vmem [#allocation0], 70
    %1675 = vst.msk [vmem:[%s1674] sm:$0xc] %vm1672, %v1671
    %s1676 = scalar_lea.vmem [#allocation0], 44
    %1677 = vst.msk [vmem:[%s1676] sm:$0x30] %vm1672, %v1671
    %s1678 = scalar_lea.vmem [#allocation0], 18
    %1679 = vst.msk [vmem:[%s1678] sm:$0xc0] %vm1672, %v1671
    %s1680 = scalar_lea.vmem %s0, 88
    %s1681 = smov 3
    %v1682 = vld [vmem:[%s1680] ss:$264 sm:%s1681]
    %s1683 = scalar_lea.vmem %s0, 4294966792
    %s1684 = smov 12
    %v1685 = vld [vmem:[%s1683] ss:$264 sm:%s1684]
    %vm1686 = vcmask 1043458
    %v1687 = vsel %vm1686, %v1685, %v1682
    %s1688 = scalar_lea.vmem %s0, 4294966456
    %s1689 = smov 48
    %v1690 = vld [vmem:[%s1688] ss:$264 sm:%s1689]
    %vm1691 = vcmask 1045508
    %v1692 = vsel %vm1691, %v1690, %v1687
    %s1693 = scalar_lea.vmem %s0, 4294965864
    %s1694 = smov 192
    %v1695 = vld [vmem:[%s1693] ss:$264 sm:%s1694]
    %vm1696 = vcmask 1047558
    %v1697 = vsel %vm1696, %v1695, %v1692
    %1698 = vrot.lane.b32.xlu0 %v1697, 16
    %v1699 = vpop.permute.xlu0 %1698
    %vm1700 = vcmask 179328
    %s1701 = scalar_lea.vmem [#allocation0], 32
    %1702 = vst.msk [vmem:[%s1701] sm:$0x3] %vm1700, %v1699
    %s1703 = scalar_lea.vmem [#allocation0], 6
    %1704 = vst.msk [vmem:[%s1703] sm:$0xc] %vm1700, %v1699
    %s1705 = scalar_lea.vmem [#allocation0], 76
    %1706 = vst.msk [vmem:[%s1705] sm:$0x30] %vm1700, %v1699
    %s1707 = scalar_lea.vmem [#allocation0], 50
    %1708 = vst.msk [vmem:[%s1707] sm:$0xc0] %vm1700, %v1699
    %s1709 = scalar_lea.vmem %s0, 173
    %s1710 = smov 3
    %v1711 = vld [vmem:[%s1709] ss:$264 sm:%s1710]
    %s1712 = scalar_lea.vmem %s0, 4294966877
    %s1713 = smov 12
    %v1714 = vld [vmem:[%s1712] ss:$264 sm:%s1713]
    %vm1715 = vcmask 1043458
    %v1716 = vsel %vm1715, %v1714, %v1711
    %s1717 = scalar_lea.vmem %s0, 4294966285
    %s1718 = smov 48
    %v1719 = vld [vmem:[%s1717] ss:$264 sm:%s1718]
    %vm1720 = vcmask 1045508
    %v1721 = vsel %vm1720, %v1719, %v1716
    %s1722 = scalar_lea.vmem %s0, 4294965949
    %s1723 = smov 192
    %v1724 = vld [vmem:[%s1722] ss:$264 sm:%s1723]
    %vm1725 = vcmask 1047558
    %v1726 = vsel %vm1725, %v1724, %v1721
    %1727 = vrot.lane.b32.xlu0 %v1726, 14
    %v1728 = vpop.permute.xlu0 %1727
    %vm1729 = vcmask 162928
    %s1730 = scalar_lea.vmem [#allocation0], 64
    %1731 = vst.msk [vmem:[%s1730] sm:$0x3] %vm1729, %v1728
    %s1732 = scalar_lea.vmem [#allocation0], 38
    %1733 = vst.msk [vmem:[%s1732] sm:$0xc] %vm1729, %v1728
    %s1734 = scalar_lea.vmem [#allocation0], 12
    %1735 = vst.msk [vmem:[%s1734] sm:$0x30] %vm1729, %v1728
    %s1736 = scalar_lea.vmem [#allocation0], 82
    %1737 = vst.msk [vmem:[%s1736] sm:$0xc0] %vm1729, %v1728
    %s1738 = scalar_lea.vmem %s0, 2
    %s1739 = smov 3
    %v1740 = vld [vmem:[%s1738] ss:$264 sm:%s1739]
    %s1741 = scalar_lea.vmem %s0, 4294966962
    %s1742 = smov 12
    %v1743 = vld [vmem:[%s1741] ss:$264 sm:%s1742]
    %vm1744 = vcmask 1043458
    %v1745 = vsel %vm1744, %v1743, %v1740
    %s1746 = scalar_lea.vmem %s0, 4294966370
    %s1747 = smov 48
    %v1748 = vld [vmem:[%s1746] ss:$264 sm:%s1747]
    %vm1749 = vcmask 1045508
    %v1750 = vsel %vm1749, %v1748, %v1745
    %s1751 = scalar_lea.vmem %s0, 4294965778
    %s1752 = smov 192
    %v1753 = vld [vmem:[%s1751] ss:$264 sm:%s1752]
    %vm1754 = vcmask 1047558
    %v1755 = vsel %vm1754, %v1753, %v1750
    %1756 = vrot.lane.b32.xlu0 %v1755, 12
    %v1757 = vpop.permute.xlu0 %1756
    %vm1758 = vcmask 146528
    %1759 = vst.msk [vmem:[#allocation0] sm:$0x3] %vm1758, %v1757
    %s1760 = scalar_lea.vmem [#allocation0], 70
    %1761 = vst.msk [vmem:[%s1760] sm:$0xc] %vm1758, %v1757
    %s1762 = scalar_lea.vmem [#allocation0], 44
    %1763 = vst.msk [vmem:[%s1762] sm:$0x30] %vm1758, %v1757
    %s1764 = scalar_lea.vmem [#allocation0], 18
    %1765 = vst.msk [vmem:[%s1764] sm:$0xc0] %vm1758, %v1757
    %s1766 = scalar_lea.vmem %s0, 258
    %s1767 = smov 3
    %v1768 = vld [vmem:[%s1766] ss:$264 sm:%s1767]
    %1769 = vrot.lane.b32.xlu0 %v1768, 12
    %v1770 = vpop.permute.xlu0 %1769
    %vm1771 = vcmask 146528
    %s1772 = scalar_lea.vmem [#allocation0], 96
    %1773 = vst.msk [vmem:[%s1772] sm:$0x3] %vm1771, %v1770
    %s1774 = scalar_lea.vmem %s0, 87
    %s1775 = smov 3
    %v1776 = vld [vmem:[%s1774] ss:$264 sm:%s1775]
    %s1777 = scalar_lea.vmem %s0, 4294966791
    %s1778 = smov 12
    %v1779 = vld [vmem:[%s1777] ss:$264 sm:%s1778]
    %vm1780 = vcmask 1043458
    %v1781 = vsel %vm1780, %v1779, %v1776
    %s1782 = scalar_lea.vmem %s0, 4294966455
    %s1783 = smov 48
    %v1784 = vld [vmem:[%s1782] ss:$264 sm:%s1783]
    %vm1785 = vcmask 1045508
    %v1786 = vsel %vm1785, %v1784, %v1781
    %s1787 = scalar_lea.vmem %s0, 4294965863
    %s1788 = smov 192
    %v1789 = vld [vmem:[%s1787] ss:$264 sm:%s1788]
    %vm1790 = vcmask 1047558
    %v1791 = vsel %vm1790, %v1789, %v1786
    %1792 = vrot.lane.b32.xlu0 %v1791, 10
    %v1793 = vpop.permute.xlu0 %1792
    %vm1794 = vcmask 130128
    %s1795 = scalar_lea.vmem [#allocation0], 32
    %1796 = vst.msk [vmem:[%s1795] sm:$0x3] %vm1794, %v1793
    %s1797 = scalar_lea.vmem [#allocation0], 6
    %1798 = vst.msk [vmem:[%s1797] sm:$0xc] %vm1794, %v1793
    %s1799 = scalar_lea.vmem [#allocation0], 76
    %1800 = vst.msk [vmem:[%s1799] sm:$0x30] %vm1794, %v1793
    %s1801 = scalar_lea.vmem [#allocation0], 50
    %1802 = vst.msk [vmem:[%s1801] sm:$0xc0] %vm1794, %v1793
    %s1803 = scalar_lea.vmem %s0, 172
    %s1804 = smov 3
    %v1805 = vld [vmem:[%s1803] ss:$264 sm:%s1804]
    %s1806 = scalar_lea.vmem %s0, 4294966876
    %s1807 = smov 12
    %v1808 = vld [vmem:[%s1806] ss:$264 sm:%s1807]
    %vm1809 = vcmask 1043458
    %v1810 = vsel %vm1809, %v1808, %v1805
    %s1811 = scalar_lea.vmem %s0, 4294966284
    %s1812 = smov 48
    %v1813 = vld [vmem:[%s1811] ss:$264 sm:%s1812]
    %vm1814 = vcmask 1045508
    %v1815 = vsel %vm1814, %v1813, %v1810
    %s1816 = scalar_lea.vmem %s0, 4294965948
    %s1817 = smov 192
    %v1818 = vld [vmem:[%s1816] ss:$264 sm:%s1817]
    %vm1819 = vcmask 1047558
    %v1820 = vsel %vm1819, %v1818, %v1815
    %1821 = vrot.lane.b32.xlu0 %v1820, 8
    %v1822 = vpop.permute.xlu0 %1821
    %vm1823 = vcmask 113728
    %s1824 = scalar_lea.vmem [#allocation0], 64
    %1825 = vst.msk [vmem:[%s1824] sm:$0x3] %vm1823, %v1822
    %s1826 = scalar_lea.vmem [#allocation0], 38
    %1827 = vst.msk [vmem:[%s1826] sm:$0xc] %vm1823, %v1822
    %s1828 = scalar_lea.vmem [#allocation0], 12
    %1829 = vst.msk [vmem:[%s1828] sm:$0x30] %vm1823, %v1822
    %s1830 = scalar_lea.vmem [#allocation0], 82
    %1831 = vst.msk [vmem:[%s1830] sm:$0xc0] %vm1823, %v1822
    %s1832 = scalar_lea.vmem %s0, 1
    %s1833 = smov 3
    %v1834 = vld [vmem:[%s1832] ss:$264 sm:%s1833]
    %s1835 = scalar_lea.vmem %s0, 4294966961
    %s1836 = smov 12
    %v1837 = vld [vmem:[%s1835] ss:$264 sm:%s1836]
    %vm1838 = vcmask 1043458
    %v1839 = vsel %vm1838, %v1837, %v1834
    %s1840 = scalar_lea.vmem %s0, 4294966369
    %s1841 = smov 48
    %v1842 = vld [vmem:[%s1840] ss:$264 sm:%s1841]
    %vm1843 = vcmask 1045508
    %v1844 = vsel %vm1843, %v1842, %v1839
    %s1845 = scalar_lea.vmem %s0, 4294965777
    %s1846 = smov 192
    %v1847 = vld [vmem:[%s1845] ss:$264 sm:%s1846]
    %vm1848 = vcmask 1047558
    %v1849 = vsel %vm1848, %v1847, %v1844
    %1850 = vrot.lane.b32.xlu0 %v1849, 6
    %v1851 = vpop.permute.xlu0 %1850
    %vm1852 = vcmask 97328
    %1853 = vst.msk [vmem:[#allocation0] sm:$0x3] %vm1852, %v1851
    %s1854 = scalar_lea.vmem [#allocation0], 70
    %1855 = vst.msk [vmem:[%s1854] sm:$0xc] %vm1852, %v1851
    %s1856 = scalar_lea.vmem [#allocation0], 44
    %1857 = vst.msk [vmem:[%s1856] sm:$0x30] %vm1852, %v1851
    %s1858 = scalar_lea.vmem [#allocation0], 18
    %1859 = vst.msk [vmem:[%s1858] sm:$0xc0] %vm1852, %v1851
    %s1860 = scalar_lea.vmem %s0, 257
    %s1861 = smov 3
    %v1862 = vld [vmem:[%s1860] ss:$264 sm:%s1861]
    %1863 = vrot.lane.b32.xlu0 %v1862, 6
    %v1864 = vpop.permute.xlu0 %1863
    %vm1865 = vcmask 97328
    %s1866 = scalar_lea.vmem [#allocation0], 96
    %1867 = vst.msk [vmem:[%s1866] sm:$0x3] %vm1865, %v1864
    %s1868 = scalar_lea.vmem %s0, 86
    %s1869 = smov 3
    %v1870 = vld [vmem:[%s1868] ss:$264 sm:%s1869]
    %s1871 = scalar_lea.vmem %s0, 4294966790
    %s1872 = smov 12
    %v1873 = vld [vmem:[%s1871] ss:$264 sm:%s1872]
    %vm1874 = vcmask 1043458
    %v1875 = vsel %vm1874, %v1873, %v1870
    %s1876 = scalar_lea.vmem %s0, 4294966454
    %s1877 = smov 48
    %v1878 = vld [vmem:[%s1876] ss:$264 sm:%s1877]
    %vm1879 = vcmask 1045508
    %v1880 = vsel %vm1879, %v1878, %v1875
    %s1881 = scalar_lea.vmem %s0, 4294965862
    %s1882 = smov 192
    %v1883 = vld [vmem:[%s1881] ss:$264 sm:%s1882]
    %vm1884 = vcmask 1047558
    %v1885 = vsel %vm1884, %v1883, %v1880
    %1886 = vrot.lane.b32.xlu0 %v1885, 4
    %v1887 = vpop.permute.xlu0 %1886
    %vm1888 = vcmask 80928
    %s1889 = scalar_lea.vmem [#allocation0], 32
    %1890 = vst.msk [vmem:[%s1889] sm:$0x3] %vm1888, %v1887
    %s1891 = scalar_lea.vmem [#allocation0], 6
    %1892 = vst.msk [vmem:[%s1891] sm:$0xc] %vm1888, %v1887
    %s1893 = scalar_lea.vmem [#allocation0], 76
    %1894 = vst.msk [vmem:[%s1893] sm:$0x30] %vm1888, %v1887
    %s1895 = scalar_lea.vmem [#allocation0], 50
    %1896 = vst.msk [vmem:[%s1895] sm:$0xc0] %vm1888, %v1887
    %s1897 = scalar_lea.vmem %s0, 171
    %s1898 = smov 3
    %v1899 = vld [vmem:[%s1897] ss:$264 sm:%s1898]
    %s1900 = scalar_lea.vmem %s0, 4294966875
    %s1901 = smov 12
    %v1902 = vld [vmem:[%s1900] ss:$264 sm:%s1901]
    %vm1903 = vcmask 1043458
    %v1904 = vsel %vm1903, %v1902, %v1899
    %s1905 = scalar_lea.vmem %s0, 4294966283
    %s1906 = smov 48
    %v1907 = vld [vmem:[%s1905] ss:$264 sm:%s1906]
    %vm1908 = vcmask 1045508
    %v1909 = vsel %vm1908, %v1907, %v1904
    %s1910 = scalar_lea.vmem %s0, 4294965947
    %s1911 = smov 192
    %v1912 = vld [vmem:[%s1910] ss:$264 sm:%s1911]
    %vm1913 = vcmask 1047558
    %v1914 = vsel %vm1913, %v1912, %v1909
    %1915 = vrot.lane.b32.xlu0 %v1914, 2
    %v1916 = vpop.permute.xlu0 %1915
    %vm1917 = vcmask 64528
    %s1918 = scalar_lea.vmem [#allocation0], 64
    %1919 = vst.msk [vmem:[%s1918] sm:$0x3] %vm1917, %v1916
    %s1920 = scalar_lea.vmem [#allocation0], 38
    %1921 = vst.msk [vmem:[%s1920] sm:$0xc] %vm1917, %v1916
    %s1922 = scalar_lea.vmem [#allocation0], 12
    %1923 = vst.msk [vmem:[%s1922] sm:$0x30] %vm1917, %v1916
    %s1924 = scalar_lea.vmem [#allocation0], 82
    %1925 = vst.msk [vmem:[%s1924] sm:$0xc0] %vm1917, %v1916
    %s1927 = ssub.s32 4, 1
    %v1928 = vld [vmem:[#allocation0] sm:%s1927]
    %s1930 = ssub.s32 4, 1
    %1931 = vst [vmem:[%s1] sm:%s1930] %v1928
    %s1932 = scalar_lea.vmem [#allocation0], 8
    %v1933 = vld [vmem:[%s1932] sm:%s1927]
    %s1935 = ssub.s32 4, 1
    %s1936 = scalar_lea.vmem %s1, 2
    %1937 = vst [vmem:[%s1936] sm:%s1935] %v1933
    %s1938 = scalar_lea.vmem [#allocation0], 16
    %v1939 = vld [vmem:[%s1938] sm:%s1927]
    %s1941 = ssub.s32 4, 1
    %s1942 = scalar_lea.vmem %s1, 4
    %1943 = vst [vmem:[%s1942] sm:%s1941] %v1939
    %s1944 = scalar_lea.vmem [#allocation0], 24
    %v1945 = vld [vmem:[%s1944] sm:%s1927]
    %s1947 = ssub.s32 4, 1
    %s1948 = scalar_lea.vmem %s1, 6
    %1949 = vst [vmem:[%s1948] sm:%s1947] %v1945
    %s1950 = scalar_lea.vmem [#allocation0], 32
    %v1951 = vld [vmem:[%s1950] sm:%s1927]
    %s1953 = ssub.s32 4, 1
    %s1954 = scalar_lea.vmem %s1, 8
    %1955 = vst [vmem:[%s1954] sm:%s1953] %v1951
    %s1956 = scalar_lea.vmem [#allocation0], 40
    %v1957 = vld [vmem:[%s1956] sm:%s1927]
    %s1959 = ssub.s32 4, 1
    %s1960 = scalar_lea.vmem %s1, 10
    %1961 = vst [vmem:[%s1960] sm:%s1959] %v1957
    %s1962 = scalar_lea.vmem [#allocation0], 48
    %v1963 = vld [vmem:[%s1962] sm:%s1927]
    %s1965 = ssub.s32 4, 1
    %s1966 = scalar_lea.vmem %s1, 12
    %1967 = vst [vmem:[%s1966] sm:%s1965] %v1963
    %s1968 = scalar_lea.vmem [#allocation0], 56
    %v1969 = vld [vmem:[%s1968] sm:%s1927]
    %s1971 = ssub.s32 4, 1
    %s1972 = scalar_lea.vmem %s1, 14
    %1973 = vst [vmem:[%s1972] sm:%s1971] %v1969
    %s1974 = scalar_lea.vmem [#allocation0], 64
    %v1975 = vld [vmem:[%s1974] sm:%s1927]
    %s1977 = ssub.s32 4, 1
    %s1978 = scalar_lea.vmem %s1, 16
    %1979 = vst [vmem:[%s1978] sm:%s1977] %v1975
    %s1980 = scalar_lea.vmem [#allocation0], 72
    %v1981 = vld [vmem:[%s1980] sm:%s1927]
    %s1983 = ssub.s32 4, 1
    %s1984 = scalar_lea.vmem %s1, 18
    %1985 = vst [vmem:[%s1984] sm:%s1983] %v1981
    %s1986 = scalar_lea.vmem [#allocation0], 80
    %v1987 = vld [vmem:[%s1986] sm:%s1927]
    %s1989 = ssub.s32 4, 1
    %s1990 = scalar_lea.vmem %s1, 20
    %1991 = vst [vmem:[%s1990] sm:%s1989] %v1987
    %s1992 = scalar_lea.vmem [#allocation0], 88
    %v1993 = vld [vmem:[%s1992] sm:%s1927]
    %s1995 = ssub.s32 4, 1
    %s1996 = scalar_lea.vmem %s1, 22
    %1997 = vst [vmem:[%s1996] sm:%s1995] %v1993
    %s1998 = scalar_lea.vmem [#allocation0], 96
    %v1999 = vld [vmem:[%s1998] sm:%s1927]
    %s2001 = ssub.s32 4, 1
    %s2002 = scalar_lea.vmem %s1, 24
    %2003 = vst [vmem:[%s2002] sm:%s2001] %v1999

// kernel: conv2d_tanh_pallas.1
$region0: #{conv2d_tanh_pallas.1}
  #allocation0 [shape = 'u32[]', space=smem, size = 0x4, offset = 0x4, fixed_abs, tag = 'smem constant byte address 0x4 - core index']
  #allocation1 [shape = 'u32[72,128]{1,0:T(1,128)}', space=vmem, size = 0x9000, scoped, tag = 'internal scratch']
  %s0 = inlined_call_operand.vmem [shape: f32[2,1554], index: 0, kind: input, shape index: {}]
  %s1 = inlined_call_operand.vmem [shape: f32[1554,128], index: 1, kind: input, shape index: {}]
  %s2 = inlined_call_operand.vmem [shape: f32[1,128], index: 2, kind: input, shape index: {}]
  %s3 = inlined_call_operand.hbm [shape: f32[2,128], index: 3, kind: output, shape index: {}]
  %s4 = sld [smem:[#allocation0]]
  $region22: #{conv2d_tanh_pallas.1} parent=0
    _
  %s6 = ssub.s32 1, %s4
  %s7 = scalar_select 0, %s6, %s4
  $region1: #{conv2d_tanh_pallas.1} parent=0
    #allocation2 [shape = 'u8[1024]{0}', space=vmem, size = 0x400, scoped, tag = 'output window, operand 0, single buffered']
    #allocation3 [shape = 's32[1]{0}', space=sflag, size = 0x4, scoped, tag = 'scoped memory for conv2d_tanh_pallas.1']
    %8 = vsyncpa [#allocation3], 0
    // Predicated region
    $region2: #{conv2d_tanh_pallas.1} parent=1 // pred_check
      _
    $region3: #{conv2d_tanh_pallas.1} parent=1 // pred_check_branch
      %10 = sbr.rel (0) target = $region5
    $region4: #{conv2d_tanh_pallas.1} parent=1 // pred_region
      _
    $region5: #{conv2d_tanh_pallas.1} parent=1 // pred_fallthru
      _
    // Predicated region
    $region6: #{conv2d_tanh_pallas.1} parent=1 // pred_check
      _
    $region7: #{conv2d_tanh_pallas.1} parent=1 // pred_check_branch
      %12 = sbr.rel (0) target = $region9
    $region8: #{conv2d_tanh_pallas.1} parent=1 // pred_region
      _
    $region9: #{conv2d_tanh_pallas.1} parent=1 // pred_fallthru
      _
    // Predicated region
    $region10: #{conv2d_tanh_pallas.1} parent=1 // pred_check
      _
    $region11: #{conv2d_tanh_pallas.1} parent=1 // pred_check_branch
      %14 = sbr.rel (0) target = $region13
    $region12: #{conv2d_tanh_pallas.1} parent=1 // pred_region
      _
    $region13: #{conv2d_tanh_pallas.1} parent=1 // pred_fallthru
      _
    %v15 = vld [vmem:[%s0] sm:$0xff]
    %v16 = vld [vmem:[%s0 + $0x8] sm:$0xff]
    %v17 = vld [vmem:[%s0 + $0x10] sm:$0xff]
    %v18 = vld [vmem:[%s0 + $0x18] sm:$0x3]
    %v19 = vld [vmem:[%s1] sm:$0xff]
    %v20 = vld [vmem:[%s1 + $0x8] sm:$0xff]
    %v21 = vld [vmem:[%s1 + $0x10] sm:$0xff]
    %v22 = vld [vmem:[%s1 + $0x18] sm:$0xff]
    %v23 = vld [vmem:[%s1 + $0x20] sm:$0xff]
    %v24 = vld [vmem:[%s1 + $0x28] sm:$0xff]
    %v25 = vld [vmem:[%s1 + $0x30] sm:$0xff]
    %v26 = vld [vmem:[%s1 + $0x38] sm:$0xff]
    %v27 = vld [vmem:[%s1 + $0x40] sm:$0xff]
    %v28 = vld [vmem:[%s1 + $0x48] sm:$0xff]
    %v29 = vld [vmem:[%s1 + $0x50] sm:$0xff]
    %v30 = vld [vmem:[%s1 + $0x58] sm:$0xff]
    %v31 = vld [vmem:[%s1 + $0x60] sm:$0xff]
    %v32 = vld [vmem:[%s1 + $0x68] sm:$0xff]
    %v33 = vld [vmem:[%s1 + $0x70] sm:$0xff]
    %v34 = vld [vmem:[%s1 + $0x78] sm:$0xff]
    %v35 = vld [vmem:[%s1 + $0x80] sm:$0xff]
    %v36 = vld [vmem:[%s1 + $0x88] sm:$0xff]
    %v37 = vld [vmem:[%s1 + $0x90] sm:$0xff]
    %v38 = vld [vmem:[%s1 + $0x98] sm:$0xff]
    %v39 = vld [vmem:[%s1 + $0xa0] sm:$0xff]
    %v40 = vld [vmem:[%s1 + $0xa8] sm:$0xff]
    %v41 = vld [vmem:[%s1 + $0xb0] sm:$0xff]
    %v42 = vld [vmem:[%s1 + $0xb8] sm:$0xff]
    %v43 = vld [vmem:[%s1 + $0xc0] sm:$0xff]
    %v44 = vld [vmem:[%s1 + $0xc8] sm:$0xff]
    %v45 = vld [vmem:[%s1 + $0xd0] sm:$0xff]
    %v46 = vld [vmem:[%s1 + $0xd8] sm:$0xff]
    %v47 = vld [vmem:[%s1 + $0xe0] sm:$0xff]
    %v48 = vld [vmem:[%s1 + $0xe8] sm:$0xff]
    %v49 = vld [vmem:[%s1 + $0xf0] sm:$0xff]
    %v50 = vld [vmem:[%s1 + $0xf8] sm:$0xff]
    %v51 = vld [vmem:[%s1 + $0x100] sm:$0xff]
    %v52 = vld [vmem:[%s1 + $0x108] sm:$0xff]
    %v53 = vld [vmem:[%s1 + $0x110] sm:$0xff]
    %v54 = vld [vmem:[%s1 + $0x118] sm:$0xff]
    %v55 = vld [vmem:[%s1 + $0x120] sm:$0xff]
    %v56 = vld [vmem:[%s1 + $0x128] sm:$0xff]
    %v57 = vld [vmem:[%s1 + $0x130] sm:$0xff]
    %v58 = vld [vmem:[%s1 + $0x138] sm:$0xff]
    %v59 = vld [vmem:[%s1 + $0x140] sm:$0xff]
    %v60 = vld [vmem:[%s1 + $0x148] sm:$0xff]
    %v61 = vld [vmem:[%s1 + $0x150] sm:$0xff]
    %v62 = vld [vmem:[%s1 + $0x158] sm:$0xff]
    %v63 = vld [vmem:[%s1 + $0x160] sm:$0xff]
    %v64 = vld [vmem:[%s1 + $0x168] sm:$0xff]
    %v65 = vld [vmem:[%s1 + $0x170] sm:$0xff]
    %v66 = vld [vmem:[%s1 + $0x178] sm:$0xff]
    %v67 = vld [vmem:[%s1 + $0x180] sm:$0xff]
    %v68 = vld [vmem:[%s1 + $0x188] sm:$0xff]
    %v69 = vld [vmem:[%s1 + $0x190] sm:$0xff]
    %v70 = vld [vmem:[%s1 + $0x198] sm:$0xff]
    %v71 = vld [vmem:[%s1 + $0x1a0] sm:$0xff]
    %v72 = vld [vmem:[%s1 + $0x1a8] sm:$0xff]
    %v73 = vld [vmem:[%s1 + $0x1b0] sm:$0xff]
    %v74 = vld [vmem:[%s1 + $0x1b8] sm:$0xff]
    %v75 = vld [vmem:[%s1 + $0x1c0] sm:$0xff]
    %v76 = vld [vmem:[%s1 + $0x1c8] sm:$0xff]
    %v77 = vld [vmem:[%s1 + $0x1d0] sm:$0xff]
    %v78 = vld [vmem:[%s1 + $0x1d8] sm:$0xff]
    %v79 = vld [vmem:[%s1 + $0x1e0] sm:$0xff]
    %v80 = vld [vmem:[%s1 + $0x1e8] sm:$0xff]
    %v81 = vld [vmem:[%s1 + $0x1f0] sm:$0xff]
    %v82 = vld [vmem:[%s1 + $0x1f8] sm:$0xff]
    %v83 = vld [vmem:[%s1 + $0x200] sm:$0xff]
    %v84 = vld [vmem:[%s1 + $0x208] sm:$0xff]
    %v85 = vld [vmem:[%s1 + $0x210] sm:$0xff]
    %v86 = vld [vmem:[%s1 + $0x218] sm:$0xff]
    %v87 = vld [vmem:[%s1 + $0x220] sm:$0xff]
    %v88 = vld [vmem:[%s1 + $0x228] sm:$0xff]
    %v89 = vld [vmem:[%s1 + $0x230] sm:$0xff]
    %v90 = vld [vmem:[%s1 + $0x238] sm:$0xff]
    %v91 = vld [vmem:[%s1 + $0x240] sm:$0xff]
    %v92 = vld [vmem:[%s1 + $0x248] sm:$0xff]
    %v93 = vld [vmem:[%s1 + $0x250] sm:$0xff]
    %v94 = vld [vmem:[%s1 + $0x258] sm:$0xff]
    %v95 = vld [vmem:[%s1 + $0x260] sm:$0xff]
    %v96 = vld [vmem:[%s1 + $0x268] sm:$0xff]
    %v97 = vld [vmem:[%s1 + $0x270] sm:$0xff]
    %v98 = vld [vmem:[%s1 + $0x278] sm:$0xff]
    %v99 = vld [vmem:[%s1 + $0x280] sm:$0xff]
    %v100 = vld [vmem:[%s1 + $0x288] sm:$0xff]
    %v101 = vld [vmem:[%s1 + $0x290] sm:$0xff]
    %v102 = vld [vmem:[%s1 + $0x298] sm:$0xff]
    %v103 = vld [vmem:[%s1 + $0x2a0] sm:$0xff]
    %v104 = vld [vmem:[%s1 + $0x2a8] sm:$0xff]
    %v105 = vld [vmem:[%s1 + $0x2b0] sm:$0xff]
    %v106 = vld [vmem:[%s1 + $0x2b8] sm:$0xff]
    %v107 = vld [vmem:[%s1 + $0x2c0] sm:$0xff]
    %v108 = vld [vmem:[%s1 + $0x2c8] sm:$0xff]
    %v109 = vld [vmem:[%s1 + $0x2d0] sm:$0xff]
    %v110 = vld [vmem:[%s1 + $0x2d8] sm:$0xff]
    %v111 = vld [vmem:[%s1 + $0x2e0] sm:$0xff]
    %v112 = vld [vmem:[%s1 + $0x2e8] sm:$0xff]
    %v113 = vld [vmem:[%s1 + $0x2f0] sm:$0xff]
    %v114 = vld [vmem:[%s1 + $0x2f8] sm:$0xff]
    %v115 = vld [vmem:[%s1 + $0x300] sm:$0xff]
    %v116 = vld [vmem:[%s1 + $0x308] sm:$0xff]
    %v117 = vld [vmem:[%s1 + $0x310] sm:$0xff]
    %v118 = vld [vmem:[%s1 + $0x318] sm:$0xff]
    %v119 = vld [vmem:[%s1 + $0x320] sm:$0xff]
    %v120 = vld [vmem:[%s1 + $0x328] sm:$0xff]
    %v121 = vld [vmem:[%s1 + $0x330] sm:$0xff]
    %v122 = vld [vmem:[%s1 + $0x338] sm:$0xff]
    %v123 = vld [vmem:[%s1 + $0x340] sm:$0xff]
    %v124 = vld [vmem:[%s1 + $0x348] sm:$0xff]
    %v125 = vld [vmem:[%s1 + $0x350] sm:$0xff]
    %v126 = vld [vmem:[%s1 + $0x358] sm:$0xff]
    %v127 = vld [vmem:[%s1 + $0x360] sm:$0xff]
    %v128 = vld [vmem:[%s1 + $0x368] sm:$0xff]
    %v129 = vld [vmem:[%s1 + $0x370] sm:$0xff]
    %v130 = vld [vmem:[%s1 + $0x378] sm:$0xff]
    %v131 = vld [vmem:[%s1 + $0x380] sm:$0xff]
    %v132 = vld [vmem:[%s1 + $0x388] sm:$0xff]
    %v133 = vld [vmem:[%s1 + $0x390] sm:$0xff]
    %v134 = vld [vmem:[%s1 + $0x398] sm:$0xff]
    %v135 = vld [vmem:[%s1 + $0x3a0] sm:$0xff]
    %v136 = vld [vmem:[%s1 + $0x3a8] sm:$0xff]
    %v137 = vld [vmem:[%s1 + $0x3b0] sm:$0xff]
    %v138 = vld [vmem:[%s1 + $0x3b8] sm:$0xff]
    %v139 = vld [vmem:[%s1 + $0x3c0] sm:$0xff]
    %v140 = vld [vmem:[%s1 + $0x3c8] sm:$0xff]
    %v141 = vld [vmem:[%s1 + $0x3d0] sm:$0xff]
    %v142 = vld [vmem:[%s1 + $0x3d8] sm:$0xff]
    %v143 = vld [vmem:[%s1 + $0x3e0] sm:$0xff]
    %v144 = vld [vmem:[%s1 + $0x3e8] sm:$0xff]
    %v145 = vld [vmem:[%s1 + $0x3f0] sm:$0xff]
    %v146 = vld [vmem:[%s1 + $0x3f8] sm:$0xff]
    %v147 = vld [vmem:[%s1 + $0x400] sm:$0xff]
    %v148 = vld [vmem:[%s1 + $0x408] sm:$0xff]
    %v149 = vld [vmem:[%s1 + $0x410] sm:$0xff]
    %v150 = vld [vmem:[%s1 + $0x418] sm:$0xff]
    %v151 = vld [vmem:[%s1 + $0x420] sm:$0xff]
    %v152 = vld [vmem:[%s1 + $0x428] sm:$0xff]
    %v153 = vld [vmem:[%s1 + $0x430] sm:$0xff]
    %v154 = vld [vmem:[%s1 + $0x438] sm:$0xff]
    %v155 = vld [vmem:[%s1 + $0x440] sm:$0xff]
    %v156 = vld [vmem:[%s1 + $0x448] sm:$0xff]
    %v157 = vld [vmem:[%s1 + $0x450] sm:$0xff]
    %v158 = vld [vmem:[%s1 + $0x458] sm:$0xff]
    %v159 = vld [vmem:[%s1 + $0x460] sm:$0xff]
    %v160 = vld [vmem:[%s1 + $0x468] sm:$0xff]
    %v161 = vld [vmem:[%s1 + $0x470] sm:$0xff]
    %v162 = vld [vmem:[%s1 + $0x478] sm:$0xff]
    %v163 = vld [vmem:[%s1 + $0x480] sm:$0xff]
    %v164 = vld [vmem:[%s1 + $0x488] sm:$0xff]
    %v165 = vld [vmem:[%s1 + $0x490] sm:$0xff]
    %v166 = vld [vmem:[%s1 + $0x498] sm:$0xff]
    %v167 = vld [vmem:[%s1 + $0x4a0] sm:$0xff]
    %v168 = vld [vmem:[%s1 + $0x4a8] sm:$0xff]
    %v169 = vld [vmem:[%s1 + $0x4b0] sm:$0xff]
    %v170 = vld [vmem:[%s1 + $0x4b8] sm:$0xff]
    %v171 = vld [vmem:[%s1 + $0x4c0] sm:$0xff]
    %v172 = vld [vmem:[%s1 + $0x4c8] sm:$0xff]
    %v173 = vld [vmem:[%s1 + $0x4d0] sm:$0xff]
    %v174 = vld [vmem:[%s1 + $0x4d8] sm:$0xff]
    %v175 = vld [vmem:[%s1 + $0x4e0] sm:$0xff]
    %v176 = vld [vmem:[%s1 + $0x4e8] sm:$0xff]
    %v177 = vld [vmem:[%s1 + $0x4f0] sm:$0xff]
    %v178 = vld [vmem:[%s1 + $0x4f8] sm:$0xff]
    %v179 = vld [vmem:[%s1 + $0x500] sm:$0xff]
    %v180 = vld [vmem:[%s1 + $0x508] sm:$0xff]
    %v181 = vld [vmem:[%s1 + $0x510] sm:$0xff]
    %v182 = vld [vmem:[%s1 + $0x518] sm:$0xff]
    %v183 = vld [vmem:[%s1 + $0x520] sm:$0xff]
    %v184 = vld [vmem:[%s1 + $0x528] sm:$0xff]
    %v185 = vld [vmem:[%s1 + $0x530] sm:$0xff]
    %v186 = vld [vmem:[%s1 + $0x538] sm:$0xff]
    %v187 = vld [vmem:[%s1 + $0x540] sm:$0xff]
    %v188 = vld [vmem:[%s1 + $0x548] sm:$0xff]
    %v189 = vld [vmem:[%s1 + $0x550] sm:$0xff]
    %v190 = vld [vmem:[%s1 + $0x558] sm:$0xff]
    %v191 = vld [vmem:[%s1 + $0x560] sm:$0xff]
    %v192 = vld [vmem:[%s1 + $0x568] sm:$0xff]
    %v193 = vld [vmem:[%s1 + $0x570] sm:$0xff]
    %v194 = vld [vmem:[%s1 + $0x578] sm:$0xff]
    %v195 = vld [vmem:[%s1 + $0x580] sm:$0xff]
    %v196 = vld [vmem:[%s1 + $0x588] sm:$0xff]
    %v197 = vld [vmem:[%s1 + $0x590] sm:$0xff]
    %v198 = vld [vmem:[%s1 + $0x598] sm:$0xff]
    %v199 = vld [vmem:[%s1 + $0x5a0] sm:$0xff]
    %v200 = vld [vmem:[%s1 + $0x5a8] sm:$0xff]
    %v201 = vld [vmem:[%s1 + $0x5b0] sm:$0xff]
    %v202 = vld [vmem:[%s1 + $0x5b8] sm:$0xff]
    %v203 = vld [vmem:[%s1 + $0x5c0] sm:$0xff]
    %v204 = vld [vmem:[%s1 + $0x5c8] sm:$0xff]
    %v205 = vld [vmem:[%s1 + $0x5d0] sm:$0xff]
    %v206 = vld [vmem:[%s1 + $0x5d8] sm:$0xff]
    %v207 = vld [vmem:[%s1 + $0x5e0] sm:$0xff]
    %v208 = vld [vmem:[%s1 + $0x5e8] sm:$0xff]
    %v209 = vld [vmem:[%s1 + $0x5f0] sm:$0xff]
    %v210 = vld [vmem:[%s1 + $0x5f8] sm:$0xff]
    %v211 = vld [vmem:[%s1 + $0x600] sm:$0xff]
    %v212 = vld [vmem:[%s1 + $0x608] sm:$0xff]
    %v213 = vld [vmem:[%s1 + $0x610] sm:$0x3]
    %v214 = vld [vmem:[%s2] sm:$0x1]
    %v216 = vperm.slane %v214, 0
    %222 = vst [vmem:[#allocation1] ss:$4 sm:$0xff] %v15
    %s223 = scalar_lea.vmem [#allocation1], 32
    %224 = vst [vmem:[%s223] ss:$4 sm:$0xff] %v16
    %v225 = vld.sshfl [vmem:[#allocation1] sm:$0xff pattern:$0x73625140]
    %v226 = vld.sshfl [vmem:[#allocation1 + $0x8] sm:$0xff pattern:$0x73625140]
    %v227 = vld.sshfl [vmem:[#allocation1 + $0x10] sm:$0xff pattern:$0x73625140]
    %v228 = vld.sshfl [vmem:[#allocation1 + $0x18] sm:$0xff pattern:$0x73625140]
    %v229 = vld.sshfl [vmem:[#allocation1 + $0x20] sm:$0xff pattern:$0x73625140]
    %v230 = vld.sshfl [vmem:[#allocation1 + $0x28] sm:$0xff pattern:$0x73625140]
    %v231 = vld.sshfl [vmem:[#allocation1 + $0x30] sm:$0xff pattern:$0x73625140]
    %v232 = vld.sshfl [vmem:[#allocation1 + $0x38] sm:$0xff pattern:$0x73625140]
    %233 = vst [vmem:[#allocation1] ss:$4 sm:$0xff] %v17
    %234 = vst [vmem:[%s223] ss:$4 sm:$0xff] %v18
    %v235 = vld.sshfl [vmem:[#allocation1] sm:$0xff pattern:$0x73625140]
    %v236 = vld.sshfl [vmem:[#allocation1 + $0x8] sm:$0xff pattern:$0x73625140]
    %v237 = vld.sshfl [vmem:[#allocation1 + $0x10] sm:$0xff pattern:$0x73625140]
    %v238 = vld.sshfl [vmem:[#allocation1 + $0x18] sm:$0xff pattern:$0x73625140]
    %v239 = vld.sshfl [vmem:[#allocation1 + $0x20] sm:$0xff pattern:$0x73625140]
    %vm252 = vcmask 146432
    %v253 = vsel %vm252, %v239, 0
    %vm255 = vcmask 1041408
    %v257 = vsel %vm255, %v213, 0
    %259 = vmatpush.msra.mxu0 %v34
    %260 = vmatpush.msra.mxu0 %v33
    %261 = vmatpush.msra.mxu0 %v32
    %262 = vmatpush.msra.mxu0 %v31
    %263 = vmatpush.msra.mxu0 %v30
    %264 = vmatpush.msra.mxu0 %v29
    %265 = vmatpush.msra.mxu0 %v28
    %266 = vmatpush.msra.mxu0 %v27
    %267 = vmatpush.msra.mxu0 %v26
    %268 = vmatpush.msra.mxu0 %v25
    %269 = vmatpush.msra.mxu0 %v24
    %270 = vmatpush.msra.mxu0 %v23
    %271 = vmatpush.msra.mxu0 %v22
    %272 = vmatpush.msra.mxu0 %v21
    %273 = vmatpush.msra.mxu0 %v20
    %274 = vmatpush.msra.mxu0 %v19
    %275 = vmatmul.f32.gmra.mxu0 %v225
    %v276 = vpop.f32.mrf.mxu0
    %v277 = vadd.f32 %v216, %v276
    %278 = vdwg.mxu0
    %279 = vmatpush.msra.mxu0 %v50
    %280 = vmatpush.msra.mxu0 %v49
    %281 = vmatpush.msra.mxu0 %v48
    %282 = vmatpush.msra.mxu0 %v47
    %283 = vmatpush.msra.mxu0 %v46
    %284 = vmatpush.msra.mxu0 %v45
    %285 = vmatpush.msra.mxu0 %v44
    %286 = vmatpush.msra.mxu0 %v43
    %287 = vmatpush.msra.mxu0 %v42
    %288 = vmatpush.msra.mxu0 %v41
    %289 = vmatpush.msra.mxu0 %v40
    %290 = vmatpush.msra.mxu0 %v39
    %291 = vmatpush.msra.mxu0 %v38
    %292 = vmatpush.msra.mxu0 %v37
    %293 = vmatpush.msra.mxu0 %v36
    %294 = vmatpush.msra.mxu0 %v35
    %295 = vmatmul.f32.gmra.mxu0 %v226
    %v296 = vpop.f32.mrf.mxu0
    %v297 = vadd.f32 %v277, %v296
    %298 = vdwg.mxu0
    %299 = vmatpush.msra.mxu0 %v66
    %300 = vmatpush.msra.mxu0 %v65
    %301 = vmatpush.msra.mxu0 %v64
    %302 = vmatpush.msra.mxu0 %v63
    %303 = vmatpush.msra.mxu0 %v62
    %304 = vmatpush.msra.mxu0 %v61
    %305 = vmatpush.msra.mxu0 %v60
    %306 = vmatpush.msra.mxu0 %v59
    %307 = vmatpush.msra.mxu0 %v58
    %308 = vmatpush.msra.mxu0 %v57
    %309 = vmatpush.msra.mxu0 %v56
    %310 = vmatpush.msra.mxu0 %v55
    %311 = vmatpush.msra.mxu0 %v54
    %312 = vmatpush.msra.mxu0 %v53
    %313 = vmatpush.msra.mxu0 %v52
    %314 = vmatpush.msra.mxu0 %v51
    %315 = vmatmul.f32.gmra.mxu0 %v227
    %v316 = vpop.f32.mrf.mxu0
    %v317 = vadd.f32 %v297, %v316
    %318 = vdwg.mxu0
    %319 = vmatpush.msra.mxu0 %v82
    %320 = vmatpush.msra.mxu0 %v81
    %321 = vmatpush.msra.mxu0 %v80
    %322 = vmatpush.msra.mxu0 %v79
    %323 = vmatpush.msra.mxu0 %v78
    %324 = vmatpush.msra.mxu0 %v77
    %325 = vmatpush.msra.mxu0 %v76
    %326 = vmatpush.msra.mxu0 %v75
    %327 = vmatpush.msra.mxu0 %v74
    %328 = vmatpush.msra.mxu0 %v73
    %329 = vmatpush.msra.mxu0 %v72
    %330 = vmatpush.msra.mxu0 %v71
    %331 = vmatpush.msra.mxu0 %v70
    %332 = vmatpush.msra.mxu0 %v69
    %333 = vmatpush.msra.mxu0 %v68
    %334 = vmatpush.msra.mxu0 %v67
    %335 = vmatmul.f32.gmra.mxu0 %v228
    %v336 = vpop.f32.mrf.mxu0
    %v337 = vadd.f32 %v317, %v336
    %338 = vdwg.mxu0
    %339 = vmatpush.msra.mxu0 %v98
    %340 = vmatpush.msra.mxu0 %v97
    %341 = vmatpush.msra.mxu0 %v96
    %342 = vmatpush.msra.mxu0 %v95
    %343 = vmatpush.msra.mxu0 %v94
    %344 = vmatpush.msra.mxu0 %v93
    %345 = vmatpush.msra.mxu0 %v92
    %346 = vmatpush.msra.mxu0 %v91
    %347 = vmatpush.msra.mxu0 %v90
    %348 = vmatpush.msra.mxu0 %v89
    %349 = vmatpush.msra.mxu0 %v88
    %350 = vmatpush.msra.mxu0 %v87
    %351 = vmatpush.msra.mxu0 %v86
    %352 = vmatpush.msra.mxu0 %v85
    %353 = vmatpush.msra.mxu0 %v84
    %354 = vmatpush.msra.mxu0 %v83
    %355 = vmatmul.f32.gmra.mxu0 %v229
    %v356 = vpop.f32.mrf.mxu0
    %v357 = vadd.f32 %v337, %v356
    %358 = vdwg.mxu0
    %359 = vmatpush.msra.mxu0 %v114
    %360 = vmatpush.msra.mxu0 %v113
    %361 = vmatpush.msra.mxu0 %v112
    %362 = vmatpush.msra.mxu0 %v111
    %363 = vmatpush.msra.mxu0 %v110
    %364 = vmatpush.msra.mxu0 %v109
    %365 = vmatpush.msra.mxu0 %v108
    %366 = vmatpush.msra.mxu0 %v107
    %367 = vmatpush.msra.mxu0 %v106
    %368 = vmatpush.msra.mxu0 %v105
    %369 = vmatpush.msra.mxu0 %v104
    %370 = vmatpush.msra.mxu0 %v103
    %371 = vmatpush.msra.mxu0 %v102
    %372 = vmatpush.msra.mxu0 %v101
    %373 = vmatpush.msra.mxu0 %v100
    %374 = vmatpush.msra.mxu0 %v99
    %375 = vmatmul.f32.gmra.mxu0 %v230
    %v376 = vpop.f32.mrf.mxu0
    %v377 = vadd.f32 %v357, %v376
    %378 = vdwg.mxu0
    %379 = vmatpush.msra.mxu0 %v130
    %380 = vmatpush.msra.mxu0 %v129
    %381 = vmatpush.msra.mxu0 %v128
    %382 = vmatpush.msra.mxu0 %v127
    %383 = vmatpush.msra.mxu0 %v126
    %384 = vmatpush.msra.mxu0 %v125
    %385 = vmatpush.msra.mxu0 %v124
    %386 = vmatpush.msra.mxu0 %v123
    %387 = vmatpush.msra.mxu0 %v122
    %388 = vmatpush.msra.mxu0 %v121
    %389 = vmatpush.msra.mxu0 %v120
    %390 = vmatpush.msra.mxu0 %v119
    %391 = vmatpush.msra.mxu0 %v118
    %392 = vmatpush.msra.mxu0 %v117
    %393 = vmatpush.msra.mxu0 %v116
    %394 = vmatpush.msra.mxu0 %v115
    %395 = vmatmul.f32.gmra.mxu0 %v231
    %v396 = vpop.f32.mrf.mxu0
    %v397 = vadd.f32 %v377, %v396
    %398 = vdwg.mxu0
    %399 = vmatpush.msra.mxu0 %v146
    %400 = vmatpush.msra.mxu0 %v145
    %401 = vmatpush.msra.mxu0 %v144
    %402 = vmatpush.msra.mxu0 %v143
    %403 = vmatpush.msra.mxu0 %v142
    %404 = vmatpush.msra.mxu0 %v141
    %405 = vmatpush.msra.mxu0 %v140
    %406 = vmatpush.msra.mxu0 %v139
    %407 = vmatpush.msra.mxu0 %v138
    %408 = vmatpush.msra.mxu0 %v137
    %409 = vmatpush.msra.mxu0 %v136
    %410 = vmatpush.msra.mxu0 %v135
    %411 = vmatpush.msra.mxu0 %v134
    %412 = vmatpush.msra.mxu0 %v133
    %413 = vmatpush.msra.mxu0 %v132
    %414 = vmatpush.msra.mxu0 %v131
    %415 = vmatmul.f32.gmra.mxu0 %v232
    %v416 = vpop.f32.mrf.mxu0
    %v417 = vadd.f32 %v397, %v416
    %418 = vdwg.mxu0
    %419 = vmatpush.msra.mxu0 %v162
    %420 = vmatpush.msra.mxu0 %v161
    %421 = vmatpush.msra.mxu0 %v160
    %422 = vmatpush.msra.mxu0 %v159
    %423 = vmatpush.msra.mxu0 %v158
    %424 = vmatpush.msra.mxu0 %v157
    %425 = vmatpush.msra.mxu0 %v156
    %426 = vmatpush.msra.mxu0 %v155
    %427 = vmatpush.msra.mxu0 %v154
    %428 = vmatpush.msra.mxu0 %v153
    %429 = vmatpush.msra.mxu0 %v152
    %430 = vmatpush.msra.mxu0 %v151
    %431 = vmatpush.msra.mxu0 %v150
    %432 = vmatpush.msra.mxu0 %v149
    %433 = vmatpush.msra.mxu0 %v148
    %434 = vmatpush.msra.mxu0 %v147
    %435 = vmatmul.f32.gmra.mxu0 %v235
    %v436 = vpop.f32.mrf.mxu0
    %v437 = vadd.f32 %v417, %v436
    %438 = vdwg.mxu0
    %439 = vmatpush.msra.mxu0 %v178
    %440 = vmatpush.msra.mxu0 %v177
    %441 = vmatpush.msra.mxu0 %v176
    %442 = vmatpush.msra.mxu0 %v175
    %443 = vmatpush.msra.mxu0 %v174
    %444 = vmatpush.msra.mxu0 %v173
    %445 = vmatpush.msra.mxu0 %v172
    %446 = vmatpush.msra.mxu0 %v171
    %447 = vmatpush.msra.mxu0 %v170
    %448 = vmatpush.msra.mxu0 %v169
    %449 = vmatpush.msra.mxu0 %v168
    %450 = vmatpush.msra.mxu0 %v167
    %451 = vmatpush.msra.mxu0 %v166
    %452 = vmatpush.msra.mxu0 %v165
    %453 = vmatpush.msra.mxu0 %v164
    %454 = vmatpush.msra.mxu0 %v163
    %455 = vmatmul.f32.gmra.mxu0 %v236
    %v456 = vpop.f32.mrf.mxu0
    %v457 = vadd.f32 %v437, %v456
    %458 = vdwg.mxu0
    %459 = vmatpush.msra.mxu0 %v194
    %460 = vmatpush.msra.mxu0 %v193
    %461 = vmatpush.msra.mxu0 %v192
    %462 = vmatpush.msra.mxu0 %v191
    %463 = vmatpush.msra.mxu0 %v190
    %464 = vmatpush.msra.mxu0 %v189
    %465 = vmatpush.msra.mxu0 %v188
    %466 = vmatpush.msra.mxu0 %v187
    %467 = vmatpush.msra.mxu0 %v186
    %468 = vmatpush.msra.mxu0 %v185
    %469 = vmatpush.msra.mxu0 %v184
    %470 = vmatpush.msra.mxu0 %v183
    %471 = vmatpush.msra.mxu0 %v182
    %472 = vmatpush.msra.mxu0 %v181
    %473 = vmatpush.msra.mxu0 %v180
    %474 = vmatpush.msra.mxu0 %v179
    %475 = vmatmul.f32.gmra.mxu0 %v237
    %v476 = vpop.f32.mrf.mxu0
    %v477 = vadd.f32 %v457, %v476
    %478 = vdwg.mxu0
    %479 = vmatpush.msra.mxu0 %v210
    %480 = vmatpush.msra.mxu0 %v209
    %481 = vmatpush.msra.mxu0 %v208
    %482 = vmatpush.msra.mxu0 %v207
    %483 = vmatpush.msra.mxu0 %v206
    %484 = vmatpush.msra.mxu0 %v205
    %485 = vmatpush.msra.mxu0 %v204
    %486 = vmatpush.msra.mxu0 %v203
    %487 = vmatpush.msra.mxu0 %v202
    %488 = vmatpush.msra.mxu0 %v201
    %489 = vmatpush.msra.mxu0 %v200
    %490 = vmatpush.msra.mxu0 %v199
    %491 = vmatpush.msra.mxu0 %v198
    %492 = vmatpush.msra.mxu0 %v197
    %493 = vmatpush.msra.mxu0 %v196
    %494 = vmatpush.msra.mxu0 %v195
    %495 = vmatmul.f32.gmra.mxu0 %v238
    %v496 = vpop.f32.mrf.mxu0
    %v497 = vadd.f32 %v477, %v496
    %498 = vdwg.mxu0
    %499 = vmatpush.msra.mxu0 0.0
    %500 = vmatpush.msra.mxu0 0.0
    %501 = vmatpush.msra.mxu0 0.0
    %502 = vmatpush.msra.mxu0 0.0
    %503 = vmatpush.msra.mxu0 0.0
    %504 = vmatpush.msra.mxu0 0.0
    %505 = vmatpush.msra.mxu0 0.0
    %506 = vmatpush.msra.mxu0 0.0
    %507 = vmatpush.msra.mxu0 0.0
    %508 = vmatpush.msra.mxu0 0.0
    %509 = vmatpush.msra.mxu0 0.0
    %510 = vmatpush.msra.mxu0 0.0
    %511 = vmatpush.msra.mxu0 0.0
    %512 = vmatpush.msra.mxu0 %v257
    %513 = vmatpush.msra.mxu0 %v212
    %514 = vmatpush.msra.mxu0 %v211
    %515 = vmatmul.f32.gmra.mxu0 %v253
    %v516 = vpop.f32.mrf.mxu0
    %v517 = vadd.f32 %v497, %v516
    %518 = vdwg.mxu0
    %v519 = vtanh.pop %v517
    %520 = vst [vmem:[#allocation2] sm:$0x3] %v519
    // Predicated region
    $region14: #{conv2d_tanh_pallas.1} parent=1 // pred_check
      _
    $region15: #{conv2d_tanh_pallas.1} parent=1 // pred_check_branch
      %522 = sbr.rel (0) target = $region17
    $region16: #{conv2d_tanh_pallas.1} parent=1 // pred_region
      %524 = vsyncadd [#allocation3], 0
      %s526 = sshll.u32 [#allocation2], 4
      %s527 = int_to_ptr.vmem [resolvable:$true] %s526
      %s528 = sshll.u32 %s3, 4
      %s529 = int_to_ptr.hbm [resolvable:$true] %s528
      %531 = dma.vmem_to_hbm [thread:$0]  %s527, 32, %s529, [#allocation3]
    $region17: #{conv2d_tanh_pallas.1} parent=1 // pred_fallthru
      _
    // Predicated region
    $region18: #{conv2d_tanh_pallas.1} parent=1 // pred_check
      _
    $region19: #{conv2d_tanh_pallas.1} parent=1 // pred_check_branch
      %533 = sbr.rel (0) target = $region21
    $region20: #{conv2d_tanh_pallas.1} parent=1 // pred_region
      %535 = dma.done [#allocation3], 32
    $region21: #{conv2d_tanh_pallas.1} parent=1 // pred_fallthru
      _
    %536 = vsyncpa [#allocation3], 1

</llo_original>
